<compile_context>
chip_gen: v6e
topology: v6e:2x2x1
jax: 0.10.0
libtpu: 0.0.40
codegen_flags: <defaults>
</compile_context>

<pallas_src>
import functools

import jax
import jax.numpy as jnp
from jax import lax
from jax.experimental import pallas as pl
from jax.experimental.pallas import tpu as pltpu


# ---------------------------------------------------------------------------
# Helpers
# ---------------------------------------------------------------------------
def _pick_tile(dim: int, target: int) -> int:
    """Largest multiple-of-8 divisor of `dim` that is <= target (else full `dim`)."""
    start = (min(target, dim) // 8) * 8
    for cand in range(start, 0, -8):
        if dim % cand == 0:
            return cand
    return dim


def _vmem_limit_bytes() -> int:
    """Generation-aware VMEM budget (v5e/v6e: 128 MiB physical, v7x: 64 MiB)."""
    cap = 128 * 1024 * 1024
    try:
        info = pltpu.get_tpu_info()
        cap = int(getattr(info, "vmem_capacity_bytes", cap))
    except Exception:
        pass
    # Leave ~15% headroom for Mosaic-internal scratch; cap at ~110 MiB on 128 MiB parts.
    return int(min(cap * 0.85, 110 * 1024 * 1024))


def _resident_spec(shape):
    """Weight/bias block: constant index map, single-buffered (no point double-buffering)."""
    return pl.BlockSpec(shape, lambda b, t: (0,) * len(shape),
                        pipeline_mode=pl.Buffered(1))


# ---------------------------------------------------------------------------
# Kernel A: fused QKV projection
# ---------------------------------------------------------------------------
def qkv_proj_kernel(x_ref, wqkv_ref, bqkv_ref, qkv_ref):
    # x_ref    : (1, Ts, H)    compute dtype
    # wqkv_ref : (H, 3H)       compute dtype (single-buffered, resident)
    # bqkv_ref : (1, 3H)       f32
    # qkv_ref  : (1, Ts, 3H)   compute dtype
    acc = jnp.dot(x_ref[0], wqkv_ref[...], preferred_element_type=jnp.float32)
    acc = acc + bqkv_ref[...]
    qkv_ref[0] = acc.astype(qkv_ref.dtype)


# ---------------------------------------------------------------------------
# Kernel B: per-head attention (query-tiled) + fused output projection
# ---------------------------------------------------------------------------
def attn_out_kernel(q_ref, k_ref, v_ref, wo_ref, bo_ref, o_ref, ctx_ref,
                    *, num_heads, scaling, exp_dtype):
    # q_ref  : (1, Tq, H)   compute dtype   (columns [0, H) of qkv, current q tile)
    # k_ref  : (1, S,  H)   compute dtype   (columns [H, 2H), full sequence)
    # v_ref  : (1, S,  H)   compute dtype   (columns [2H, 3H), full sequence)
    # wo_ref : (H, H)       compute dtype   (single-buffered, resident)
    # bo_ref : (1, H)       f32
    # o_ref  : (1, Tq, H)
    # ctx_ref: (Tq, H) f32 VMEM scratch accumulator for the per-head contexts
    H = wo_ref.shape[0]
    D = H // num_heads
    cdtype = q_ref.dtype

    for h in range(num_heads):
        sl = slice(h * D, (h + 1) * D)
        qh = q_ref[0, :, sl] * scaling            # (Tq, D), scaling folded into q
        kh = k_ref[0, :, sl]                      # (S,  D)
        vh = v_ref[0, :, sl]                      # (S,  D)

        # scores = q @ k.T without materializing a transpose of k; f32 accumulation.
        s = lax.dot_general(qh, kh, (((1,), (1,)), ((), ())),
                            preferred_element_type=jnp.float32)       # (Tq, S)

        # Numerically-stable softmax; exp optionally in bf16 (EUP relief on v6e/v7x),
        # stats kept in f32, normalization folded after the PV matmul (scales Tq*D,
        # not Tq*S) with the EUP approximate reciprocal.
        m = jnp.max(s, axis=-1, keepdims=True)
        p = jnp.exp((s - m).astype(exp_dtype))
        l = jnp.sum(p.astype(jnp.float32), axis=-1, keepdims=True)
        inv = pl.reciprocal(l, approx=True)                           # (Tq, 1) f32

        pv = jnp.dot(p.astype(cdtype), vh,
                     preferred_element_type=jnp.float32)              # (Tq, D) f32
        ctx_ref[:, sl] = pv * inv

    # Output projection fused in-kernel, K = H kept un-split; lane-dense (Tq, H) store.
    y = jnp.dot(ctx_ref[...].astype(cdtype), wo_ref[...],
                preferred_element_type=jnp.float32)
    y = y + bo_ref[...]
    o_ref[0] = y.astype(o_ref.dtype)


# ---------------------------------------------------------------------------
# Wrapper
# ---------------------------------------------------------------------------
def dinov2_attention(hidden_states, params, *, num_heads,
                     compute_dtype=None, q_block=256, s_block=512):
    """Forward pass of Dinov2Attention.

    hidden_states: [B, S, H]
    params: wq, wk, wv, wo stored as [in, out] ( == torch weight.T ), biases as [H].
    compute_dtype: dtype fed to the MXU (bf16 recommended in production); f32 accum.
    """
    B, S, H = hidden_states.shape
    assert H % num_heads == 0
    D = H // num_heads
    scaling = float(D) ** -0.5
    out_dtype = hidden_states.dtype
    if compute_dtype is None:
        compute_dtype = hidden_states.dtype
    compute_dtype = jnp.dtype(compute_dtype)
    # bf16 exp only pays off where the EUP has bf16 (v6e/v7x); it is still correct on v5e.
    exp_dtype = jnp.bfloat16 if compute_dtype == jnp.bfloat16 else jnp.float32

    Ts = _pick_tile(S, s_block)
    Tq = _pick_tile(S, q_block)
    vmem_lim = _vmem_limit_bytes()

    # Fused projection weights/biases:  x @ W_qkv -> [q | k | v].
    w_qkv = jnp.concatenate([params["wq"], params["wk"], params["wv"]],
                            axis=1).astype(compute_dtype)              # (H, 3H)
    b_qkv = jnp.concatenate([params["bq"], params["bk"], params["bv"]]
                            ).reshape(1, 3 * H).astype(jnp.float32)    # (1, 3H)
    wo = params["wo"].astype(compute_dtype)                            # (H, H)
    bo = params["bo"].reshape(1, H).astype(jnp.float32)                # (1, H)
    x = hidden_states.astype(compute_dtype)

    # ---- Kernel A: QKV projection --------------------------------------------------
    qkv = pl.pallas_call(
        qkv_proj_kernel,
        out_shape=jax.ShapeDtypeStruct((B, S, 3 * H), compute_dtype),
        grid_spec=pltpu.PrefetchScalarGridSpec(
            num_scalar_prefetch=0,
            grid=(B, S // Ts),
            in_specs=[
                pl.BlockSpec((1, Ts, H), lambda b, t: (b, t, 0)),      # x tile
                _resident_spec((H, 3 * H)),                            # W_qkv
                _resident_spec((1, 3 * H)),                            # b_qkv
            ],
            out_specs=pl.BlockSpec((1, Ts, 3 * H), lambda b, t: (b, t, 0)),
        ),
        compiler_params=pltpu.CompilerParams(
            dimension_semantics=("parallel", "parallel"),
            vmem_limit_bytes=vmem_lim,
        ),
    )(x, w_qkv, b_qkv)

    # ---- Kernel B: query-tiled attention + output projection -----------------------
    kernel = functools.partial(attn_out_kernel, num_heads=num_heads,
                               scaling=scaling, exp_dtype=exp_dtype)
    out = pl.pallas_call(
        kernel,
        out_shape=jax.ShapeDtypeStruct((B, S, H), out_dtype),
        grid_spec=pltpu.PrefetchScalarGridSpec(
            num_scalar_prefetch=0,
            grid=(B, S // Tq),
            in_specs=[
                pl.BlockSpec((1, Tq, H), lambda b, q: (b, q, 0)),      # q tile
                pl.BlockSpec((1, S, H), lambda b, q: (b, 0, 1)),       # k (full seq)
                pl.BlockSpec((1, S, H), lambda b, q: (b, 0, 2)),       # v (full seq)
                _resident_spec((H, H)),                                # Wo
                _resident_spec((1, H)),                                # bo
            ],
            out_specs=pl.BlockSpec((1, Tq, H), lambda b, q: (b, q, 0)),
            scratch_shapes=[pltpu.VMEM((Tq, H), jnp.float32)],         # ctx accumulator
        ),
        compiler_params=pltpu.CompilerParams(
            dimension_semantics=("parallel", "parallel"),
            vmem_limit_bytes=vmem_lim,
        ),
    )(qkv, qkv, qkv, wo, bo)
    return out


# ---------------------------------------------------------------------------
# Pure-JAX reference (mirrors the PyTorch forward exactly)
# ---------------------------------------------------------------------------
def dinov2_attention_ref(x, params, *, num_heads):
    B, S, H = x.shape
    D = H // num_heads
    scaling = float(D) ** -0.5

    def split_heads(t):  # [B,S,H] -> [B,nh,S,D]
        return jnp.transpose(t.reshape(B, S, num_heads, D), (0, 2, 1, 3))

    q = split_heads(x @ params["wq"] + params["bq"])
    k = split_heads(x @ params["wk"] + params["bk"])
    v = split_heads(x @ params["wv"] + params["bv"])

    attn = jax.nn.softmax(jnp.einsum("bhqd,bhkd->bhqk", q, k) * scaling, axis=-1)
    ctx = jnp.einsum("bhqk,bhkd->bhqd", attn, v)
    ctx = jnp.transpose(ctx, (0, 2, 1, 3)).reshape(B, S, H)
    return ctx @ params["wo"] + params["bo"]


if __name__ == "__main__":
    # Small shapes consistent with the module structure: head_dim = 64 so
    # scaling = 0.125 (Dinov2SelfAttention default), H = num_heads * 64.
    # S = 512 so the default q_block=256 actually exercises query tiling.
    B, S, NUM_HEADS = 2, 512, 4
    H = NUM_HEADS * 64  # 256

    key = jax.random.PRNGKey(0)
    keys = jax.random.split(key, 9)
    scale = 0.02
    params = {
        "wq": scale * jax.random.normal(keys[0], (H, H), jnp.float32),
        "wk": scale * jax.random.normal(keys[1], (H, H), jnp.float32),
        "wv": scale * jax.random.normal(keys[2], (H, H), jnp.float32),
        "wo": scale * jax.random.normal(keys[3], (H, H), jnp.float32),
        "bq": scale * jax.random.normal(keys[4], (H,), jnp.float32),
        "bk": scale * jax.random.normal(keys[5], (H,), jnp.float32),
        "bv": scale * jax.random.normal(keys[6], (H,), jnp.float32),
        "bo": scale * jax.random.normal(keys[7], (H,), jnp.float32),
    }
    x = jax.random.normal(keys[8], (B, S, H), jnp.float32)

    ref = dinov2_attention_ref(x, params, num_heads=NUM_HEADS)

    # f32 MXU path (default: compute dtype == input dtype). Tolerance covers the
    # approximate-reciprocal softmax normalization.
    out = dinov2_attention(x, params, num_heads=NUM_HEADS)
    out = jax.block_until_ready(out)
    assert out.shape == (B, S, H), out.shape
    assert jnp.allclose(out, ref, atol=2e-3, rtol=2e-3), "f32 path mismatch vs reference"

    # bf16 MXU path (production configuration per perf review): bf16 operands/weights,
    # bf16 exp, f32 accumulation/stats. Looser tolerance for bf16 rounding.
    out_bf16 = dinov2_attention(x, params, num_heads=NUM_HEADS,
                                compute_dtype=jnp.bfloat16)
    out_bf16 = jax.block_until_ready(out_bf16)
    assert out_bf16.shape == (B, S, H), out_bf16.shape
    assert jnp.allclose(out_bf16.astype(jnp.float32), ref, atol=3e-2, rtol=3e-2), \
        "bf16 path mismatch vs reference"

    print("KERNEL_OK")
</pallas_src>

<mosaic_0001>
module attributes {stable_mosaic.version = 11 : i64} {
  func.func @qkv_proj_kernel(%arg0: i32, %arg1: i32, %arg2: memref<1x512x256xf32, #tpu.memory_space<vmem>>, %arg3: memref<256x768xf32, #tpu.memory_space<vmem>>, %arg4: memref<1x768xf32, #tpu.memory_space<vmem>>, %arg5: memref<1x512x768xf32, #tpu.memory_space<vmem>>) attributes {dimension_semantics = [#tpu.dimension_semantics<parallel>, #tpu.dimension_semantics<parallel>], iteration_bounds = array<i64: 2, 1>, scalar_prefetch = 0 : i64, scratch_operands = 0 : i64, tpu.core_type = #tpu.core_type<tc>, window_params = [{transform_indices = @transform_0, window_bounds = array<i64: 1, 512, 256>}, {pipeline_mode = #tpu.pipeline_mode<synchronous>, transform_indices = @transform_1, window_bounds = array<i64: 256, 768>}, {pipeline_mode = #tpu.pipeline_mode<synchronous>, transform_indices = @transform_2, window_bounds = array<i64: 1, 768>}, {transform_indices = @transform_3, window_bounds = array<i64: 1, 512, 768>}]} {
    %c0 = arith.constant 0 : index
    %c0_0 = arith.constant 0 : index
    %c0_1 = arith.constant 0 : index
    %0 = vector.load %arg2[%c0, %c0_0, %c0_1] : memref<1x512x256xf32, #tpu.memory_space<vmem>>, vector<1x512x256xf32>
    %1 = vector.shape_cast %0 : vector<1x512x256xf32> to vector<512x256xf32>
    %c0_2 = arith.constant 0 : index
    %c0_3 = arith.constant 0 : index
    %2 = vector.load %arg3[%c0_2, %c0_3] : memref<256x768xf32, #tpu.memory_space<vmem>>, vector<256x768xf32>
    %cst = arith.constant dense<0.000000e+00> : vector<512x768xf32>
    %3 = tpu.matmul %1, %2, %cst {dimension_numbers = #tpu.dot_dimension_numbers<[1], [0], [0], [1], [0, 0, 1, 1], [], []>} : vector<512x256xf32>, vector<256x768xf32>, vector<512x768xf32> -> vector<512x768xf32>
    %c0_4 = arith.constant 0 : index
    %c0_5 = arith.constant 0 : index
    %4 = vector.load %arg4[%c0_4, %c0_5] : memref<1x768xf32, #tpu.memory_space<vmem>>, vector<1x768xf32>
    %5 = vector.broadcast %4 : vector<1x768xf32> to vector<512x768xf32>
    %6 = arith.addf %3, %5 : vector<512x768xf32>
    %c0_6 = arith.constant 0 : index
    %c0_7 = arith.constant 0 : index
    %c0_8 = arith.constant 0 : index
    %7 = vector.load %arg5[%c0_6, %c0_7, %c0_8] : memref<1x512x768xf32, #tpu.memory_space<vmem>>, vector<1x512x768xf32>
    %8 = vector.shape_cast %7 : vector<1x512x768xf32> to vector<512x768xf32>
    %9 = vector.shape_cast %6 : vector<512x768xf32> to vector<1x512x768xf32>
    tpu.vector_store %arg5[%c0_6, %c0_7, %c0_8], %9 {strides = array<i32>} : memref<1x512x768xf32, #tpu.memory_space<vmem>>, vector<1x512x768xf32>,
    return
  }
  func.func @transform_0(%arg0: i32, %arg1: i32) -> (i32, i32, i32) {
    %c0_i32 = arith.constant 0 : i32
    %c0_i32_0 = arith.constant 0 : i32
    return %arg0, %arg1, %c0_i32 : i32, i32, i32
  }
  func.func @transform_1(%arg0: i32, %arg1: i32) -> (i32, i32) {
    %c0_i32 = arith.constant 0 : i32
    %c0_i32_0 = arith.constant 0 : i32
    %c0_i32_1 = arith.constant 0 : i32
    return %c0_i32, %c0_i32_0 : i32, i32
  }
  func.func @transform_2(%arg0: i32, %arg1: i32) -> (i32, i32) {
    %c0_i32 = arith.constant 0 : i32
    %c0_i32_0 = arith.constant 0 : i32
    %c0_i32_1 = arith.constant 0 : i32
    return %c0_i32, %c0_i32_0 : i32, i32
  }
  func.func @transform_3(%arg0: i32, %arg1: i32) -> (i32, i32, i32) {
    %c0_i32 = arith.constant 0 : i32
    %c0_i32_0 = arith.constant 0 : i32
    return %arg0, %arg1, %c0_i32 : i32, i32, i32
  }
}

</mosaic_0001>

<llo_original>
// kernel: tpu_custom_call.1
$region0: #{tpu_custom_call.1}
  #allocation0 [shape = 'u32[]', space=smem, size = 0x4, offset = 0x4, fixed_abs, tag = 'smem constant byte address 0x4 - core index']
  #allocation1 [shape = 'u32[144,128]{1,0:T(1,128)}', space=vmem, size = 0x12000, scoped, tag = 'internal scratch']
  %s0 = inlined_call_operand.hbm [shape: f32[2,512,256], index: 0, kind: input, shape index: {}]
  %s1 = inlined_call_operand.hbm [shape: f32[256,768], index: 1, kind: input, shape index: {}]
  %s2 = inlined_call_operand.hbm [shape: f32[1,768], index: 2, kind: input, shape index: {}]
  %s3 = inlined_call_operand.hbm [shape: f32[2,512,768], index: 3, kind: output, shape index: {}]
  %s4 = sld [smem:[#allocation0]]
  $region57: #{tpu_custom_call.1} parent=0
    _
  %s6 = ssub.s32 1, %s4
  %s7 = scalar_select 0, %s6, %s4
  $region1: #{tpu_custom_call.1} parent=0
    #allocation2 [shape = 'u8[1048576]{0}', space=vmem, size = 0x100000, scoped, tag = 'input window, operand 0']
    #allocation3 [shape = 's32[2]{0}', space=sflag, size = 0x8, scoped, tag = 'scoped memory for tpu_custom_call.1']
    #allocation4 [shape = 's32[2]{0}', space=sflag, size = 0x8, scoped, tag = 'scoped memory for tpu_custom_call.1']
    #allocation5 [shape = 'u8[786432]{0}', space=vmem, size = 0xc0000, scoped, tag = 'input window, operand 1, single buffered']
    #allocation6 [shape = 's32[1]{0}', space=sflag, size = 0x4, scoped, tag = 'scoped memory for tpu_custom_call.1']
    #allocation7 [shape = 'u8[3072]{0}', space=vmem, size = 0xc00, scoped, tag = 'input window, operand 2, single buffered']
    #allocation8 [shape = 'u8[3145728]{0}', space=vmem, size = 0x300000, scoped, tag = 'output window, operand 0']
    %8 = vsyncpa [#allocation3], 0
    %s9 = scalar_lea.sflag [#allocation3], 1
    %10 = vsyncpa %s9, 0
    %11 = vsyncpa [#allocation6], 0
    %12 = vsyncpa [#allocation4], 0
    %s13 = scalar_lea.sflag [#allocation4], 1
    %14 = vsyncpa %s13, 0
    loop: start=0, step=1, limit=4
    $region2: #{tpu_custom_call.1} parent=1 // loop_pre_header
      _
    $region3: #{tpu_custom_call.1} parent=1 // loop_header
      %s16 = sphi 0, %s20
      %p17 = scmp.ge.s32.totalorder %s16, 4
      %s23 = sphi 0, %s35
      %s24 = sphi 0, %s31
      %s25 = sphi 0, %s23
      %s26 = sphi 0, %s24
      %s27 = sphi 0, %s25
      %s28 = sphi 0, %s26
      %s40 = sphi 0, %s42
      %s43 = sphi 0, %s40
      %s44 = sphi 0, %s43
      %s60 = sphi 0, %s44
      %s64 = sphi 0, %s64
      %s66 = sphi 0, %s64
      %s67 = sphi 0, %s66
      %s81 = sphi 0, %s67
      %s85 = sphi 0, %s85
      %s87 = sphi 0, %s85
      %s88 = sphi 0, %s87
      %s102 = sphi 0, %s88
      %s110 = sphi 0, %s112
      %s113 = sphi 0, %s110
      %s114 = sphi 0, %s113
      %s130 = sphi 0, %s114
    $region4: #{tpu_custom_call.1} parent=1 // loop_header_branch
      %19 = sbr.rel (%p17) target = $region8
    $region5: #{tpu_custom_call.1} parent=1 // loop_body
      %s21 = ssub.s32 %s16, 1
      %s22 = ssub.s32 %s16, 2
      %s29 = sadd.s32 1, %s24
      %p30 = scmp.ge.s32.totalorder %s29, 1
      %s31 = scalar_select %p30, 0, %s29
      %s32 = sadd.s32 1, %s23
      %s33 = scalar_select %p30, %s32, %s23
      %p34 = scmp.ge.s32.totalorder %s33, 2
      %s35 = scalar_select %p34, 0, %s33
      %s36 = ssub.s32 %s23, %s35
      %s37 = ssub.s32 %s24, %s31
      %s38 = sor.u32 %s36, %s37
      %p39 = scmp.eq.s32.totalorder %s38, 0
      %s41 = sadd.s32 %s40, 1
      %s42 = scalar_select %p39, %s40, %s41
      %p45 = pneg %p39
      %p46 = scmp.eq.s32.totalorder %s16, 1
      %p47 = por %p45, %p46
      %p48 = scmp.ne.s32.totalorder %s40, %s43
      %p49 = scmp.eq.s32.totalorder %s16, 0
      %p50 = por %p48, %p49
      %p51 = scmp.ne.s32.totalorder %s40, %s43
      %p52 = scmp.eq.s32.totalorder %s21, 1
      %p53 = por %p51, %p52
      %p54 = scmp.ne.s32.totalorder %s43, %s44
      %p55 = scmp.eq.s32.totalorder %s21, 0
      %p56 = por %p54, %p55
      %p57 = scmp.ne.s32.totalorder %s43, %s44
      %p58 = scmp.eq.s32.totalorder %s22, 1
      %p59 = por %p57, %p58
      %p61 = scmp.ne.s32.totalorder %s44, %s60
      %p62 = scmp.eq.s32.totalorder %s22, 0
      %p63 = por %p61, %p62
      %s65 = sadd.s32 %s64, 1
      %p68 = scmp.eq.s32.totalorder %s16, 1
      %p69 = scmp.ne.s32.totalorder %s64, %s66
      %p70 = scmp.eq.s32.totalorder %s16, 0
      %p71 = por %p69, %p70
      %p72 = scmp.ne.s32.totalorder %s64, %s66
      %p73 = scmp.eq.s32.totalorder %s21, 1
      %p74 = por %p72, %p73
      %p75 = scmp.ne.s32.totalorder %s66, %s67
      %p76 = scmp.eq.s32.totalorder %s21, 0
      %p77 = por %p75, %p76
      %p78 = scmp.ne.s32.totalorder %s66, %s67
      %p79 = scmp.eq.s32.totalorder %s22, 1
      %p80 = por %p78, %p79
      %p82 = scmp.ne.s32.totalorder %s67, %s81
      %p83 = scmp.eq.s32.totalorder %s22, 0
      %p84 = por %p82, %p83
      %s86 = sadd.s32 %s85, 1
      %p89 = scmp.eq.s32.totalorder %s16, 1
      %p90 = scmp.ne.s32.totalorder %s85, %s87
      %p91 = scmp.eq.s32.totalorder %s16, 0
      %p92 = por %p90, %p91
      %p93 = scmp.ne.s32.totalorder %s85, %s87
      %p94 = scmp.eq.s32.totalorder %s21, 1
      %p95 = por %p93, %p94
      %p96 = scmp.ne.s32.totalorder %s87, %s88
      %p97 = scmp.eq.s32.totalorder %s21, 0
      %p98 = por %p96, %p97
      %p99 = scmp.ne.s32.totalorder %s87, %s88
      %p100 = scmp.eq.s32.totalorder %s22, 1
      %p101 = por %p99, %p100
      %p103 = scmp.ne.s32.totalorder %s88, %s102
      %p104 = scmp.eq.s32.totalorder %s22, 0
      %p105 = por %p103, %p104
      %s106 = ssub.s32 %s23, %s35
      %s107 = ssub.s32 %s24, %s31
      %s108 = sor.u32 %s106, %s107
      %p109 = scmp.eq.s32.totalorder %s108, 0
      %s111 = sadd.s32 %s110, 1
      %s112 = scalar_select %p109, %s110, %s111
      %p115 = pneg %p109
      %p116 = scmp.eq.s32.totalorder %s16, 1
      %p117 = por %p115, %p116
      %p118 = scmp.ne.s32.totalorder %s110, %s113
      %p119 = scmp.eq.s32.totalorder %s16, 0
      %p120 = por %p118, %p119
      %p121 = scmp.ne.s32.totalorder %s110, %s113
      %p122 = scmp.eq.s32.totalorder %s21, 1
      %p123 = por %p121, %p122
      %p124 = scmp.ne.s32.totalorder %s113, %s114
      %p125 = scmp.eq.s32.totalorder %s21, 0
      %p126 = por %p124, %p125
      %p127 = scmp.ne.s32.totalorder %s113, %s114
      %p128 = scmp.eq.s32.totalorder %s22, 1
      %p129 = por %p127, %p128
      %p131 = scmp.ne.s32.totalorder %s114, %s130
      %p132 = scmp.eq.s32.totalorder %s22, 0
      %p133 = por %p131, %p132
      %p134 = scmp.le.s32.totalorder 1, %s16
      %p135 = scmp.lt.s32.totalorder %s16, 3
      %p136 = pnand %p134, %p135
      %p137 = pneg %p136
      // Predicated region
      $region9: #{tpu_custom_call.1} parent=5 // pred_check
        _
      $region10: #{tpu_custom_call.1} parent=5 // pred_check_branch
        %139 = sbr.rel (%p136) target = $region12
      $region11: #{tpu_custom_call.1} parent=5 // pred_region
        %s140 = ssub.s32 %s16, 1
        // Predicated region
        $region13: #{tpu_custom_call.1} parent=11 // pred_check
          %p141 = pneg %p77
        $region14: #{tpu_custom_call.1} parent=11 // pred_check_branch
          %143 = sbr.rel (%p141) target = $region16
        $region15: #{tpu_custom_call.1} parent=11 // pred_region
          %s145 = ssub.s32 24576, 24576
          %146 = vsyncadd [#allocation6], %s145
          %s147 = sshll.u32 [#allocation5], 4
          %s148 = int_to_ptr.vmem [resolvable:$true] %s147
          %153 = dma.hbm_to_vmem [thread:$0]  %s1, 24576, %s148, [#allocation6], 768, 768, 48
        $region16: #{tpu_custom_call.1} parent=11 // pred_fallthru
          _
        // Predicated region
        $region17: #{tpu_custom_call.1} parent=11 // pred_check
          %p154 = pneg %p98
        $region18: #{tpu_custom_call.1} parent=11 // pred_check_branch
          %156 = sbr.rel (%p154) target = $region20
        $region19: #{tpu_custom_call.1} parent=11 // pred_region
          %s158 = ssub.s32 96, 96
          %159 = vsyncadd [#allocation6], %s158
          %s161 = sshll.u32 [#allocation7], 4
          %s162 = int_to_ptr.vmem [resolvable:$true] %s161
          %164 = dma.hbm_to_vmem [thread:$0]  %s2, 96, %s162, [#allocation6]
        $region20: #{tpu_custom_call.1} parent=11 // pred_fallthru
          _
      $region12: #{tpu_custom_call.1} parent=5 // pred_fallthru
        _
      %p165 = scmp.lt.s32.totalorder %s16, 2
      // Predicated region
      $region21: #{tpu_custom_call.1} parent=5 // pred_check
        %p166 = pneg %p165
      $region22: #{tpu_custom_call.1} parent=5 // pred_check_branch
        %168 = sbr.rel (%p166) target = $region24
      $region23: #{tpu_custom_call.1} parent=5 // pred_region
        // Predicated region
        $region25: #{tpu_custom_call.1} parent=23 // pred_check
          %p169 = pneg %p50
        $region26: #{tpu_custom_call.1} parent=23 // pred_check_branch
          %171 = sbr.rel (%p169) target = $region28
        $region27: #{tpu_custom_call.1} parent=23 // pred_region
          %s172 = sand.u32 %s40, 1
          %s173 = scalar_lea.sflag [#allocation3], %s172
          %s174 = sand.u32 %s40, 1
          %s175 = smul.addr %s174, 1024
          %s176 = scalar_lea.vmem [#allocation2], %s175
          %s177 = smul.u32 64, %s24
          %s179 = ssub.s32 16384, 16384
          %180 = vsyncadd %s173, %s179
          %s181 = smul.addr %s177, 2
          %s182 = smul.addr %s23, 128
          %s183 = sadd.s32 %s181, %s182
          %s184 = smul.addr %s183, 128
          %s185 = scalar_lea.hbm %s0, %s184
          %s186 = sshll.u32 %s176, 4
          %s187 = int_to_ptr.vmem [resolvable:$true] %s186
          %192 = dma.hbm_to_vmem [thread:$0]  %s185, 16384, %s187, %s173, 256, 256, 16
        $region28: #{tpu_custom_call.1} parent=23 // pred_fallthru
          _
      $region24: #{tpu_custom_call.1} parent=5 // pred_fallthru
        _
      %p193 = scmp.le.s32.totalorder 1, %s16
      %p194 = scmp.lt.s32.totalorder %s16, 3
      %p195 = pnand %p193, %p194
      %p196 = pneg %p195
      // Predicated region
      $region29: #{tpu_custom_call.1} parent=5 // pred_check
        _
      $region30: #{tpu_custom_call.1} parent=5 // pred_check_branch
        %198 = sbr.rel (%p195) target = $region32
      $region31: #{tpu_custom_call.1} parent=5 // pred_region
        %s199 = ssub.s32 %s16, 1
        %s200 = sand.u32 %s43, 1
        %s201 = scalar_lea.sflag [#allocation3], %s200
        %s202 = sand.u32 %s43, 1
        %s203 = smul.addr %s202, 1024
        %s204 = scalar_lea.vmem [#allocation2], %s203
        // Predicated region
        $region33: #{tpu_custom_call.1} parent=31 // pred_check
          %p205 = pneg %p56
        $region34: #{tpu_custom_call.1} parent=31 // pred_check_branch
          %207 = sbr.rel (%p205) target = $region36
        $region35: #{tpu_custom_call.1} parent=31 // pred_region
          %208 = dma.done %s201, 16384
        $region36: #{tpu_custom_call.1} parent=31 // pred_fallthru
          _
        // Predicated region
        $region37: #{tpu_custom_call.1} parent=31 // pred_check
          %p209 = pneg %p77
        $region38: #{tpu_custom_call.1} parent=31 // pred_check_branch
          %211 = sbr.rel (%p209) target = $region40
        $region39: #{tpu_custom_call.1} parent=31 // pred_region
          %212 = dma.done [#allocation6], 24576
        $region40: #{tpu_custom_call.1} parent=31 // pred_fallthru
          _
        // Predicated region
        $region41: #{tpu_custom_call.1} parent=31 // pred_check
          %p213 = pneg %p98
        $region42: #{tpu_custom_call.1} parent=31 // pred_check_branch
          %215 = sbr.rel (%p213) target = $region44
        $region43: #{tpu_custom_call.1} parent=31 // pred_region
          %216 = dma.done [#allocation6], 96
        $region44: #{tpu_custom_call.1} parent=31 // pred_fallthru
          _
        %s217 = sand.u32 %s43, 1
        %s218 = scalar_lea.sflag [#allocation3], %s217
        %s219 = sand.u32 %s43, 1
        %s220 = smul.addr %s219, 1024
        %s221 = scalar_lea.vmem [#allocation2], %s220
        %p222 = pneg %p56
        %p223 = pneg %p53
        %p224 = pneg %p77
        %p225 = pneg %p74
        %p226 = pneg %p98
        %p227 = pneg %p95
        %p228 = pneg %p126
        %p229 = pneg %p123
        %s230 = sand.u32 %s113, 1
        %s231 = scalar_lea.sflag [#allocation4], %s230
        %s232 = sand.u32 %s113, 1
        %s233 = smul.addr %s232, 3072
        %s234 = scalar_lea.vmem [#allocation8], %s233
        %s235 = smul.u32 64, %s26
        %s236 = smul.u32 64, %s26
        %v237 = vld [vmem:[%s204] sm:$0xff]
        %v238 = vld [vmem:[%s204 + $0x8] sm:$0xff]
        %v239 = vld [vmem:[%s204 + $0x10] sm:$0xff]
        %v240 = vld [vmem:[%s204 + $0x18] sm:$0xff]
        %v241 = vld [vmem:[%s204 + $0x20] sm:$0xff]
        %v242 = vld [vmem:[%s204 + $0x28] sm:$0xff]
        %v243 = vld [vmem:[%s204 + $0x30] sm:$0xff]
        %v244 = vld [vmem:[%s204 + $0x38] sm:$0xff]
        %v245 = vld [vmem:[%s204 + $0x40] sm:$0xff]
        %v246 = vld [vmem:[%s204 + $0x48] sm:$0xff]
        %v247 = vld [vmem:[%s204 + $0x50] sm:$0xff]
        %v248 = vld [vmem:[%s204 + $0x58] sm:$0xff]
        %v249 = vld [vmem:[%s204 + $0x60] sm:$0xff]
        %v250 = vld [vmem:[%s204 + $0x68] sm:$0xff]
        %v251 = vld [vmem:[%s204 + $0x70] sm:$0xff]
        %v252 = vld [vmem:[%s204 + $0x78] sm:$0xff]
        %v253 = vld [vmem:[%s204 + $0x80] sm:$0xff]
        %v254 = vld [vmem:[%s204 + $0x88] sm:$0xff]
        %v255 = vld [vmem:[%s204 + $0x90] sm:$0xff]
        %v256 = vld [vmem:[%s204 + $0x98] sm:$0xff]
        %v257 = vld [vmem:[%s204 + $0xa0] sm:$0xff]
        %v258 = vld [vmem:[%s204 + $0xa8] sm:$0xff]
        %v259 = vld [vmem:[%s204 + $0xb0] sm:$0xff]
        %v260 = vld [vmem:[%s204 + $0xb8] sm:$0xff]
        %v261 = vld [vmem:[%s204 + $0xc0] sm:$0xff]
        %v262 = vld [vmem:[%s204 + $0xc8] sm:$0xff]
        %v263 = vld [vmem:[%s204 + $0xd0] sm:$0xff]
        %v264 = vld [vmem:[%s204 + $0xd8] sm:$0xff]
        %v265 = vld [vmem:[%s204 + $0xe0] sm:$0xff]
        %v266 = vld [vmem:[%s204 + $0xe8] sm:$0xff]
        %v267 = vld [vmem:[%s204 + $0xf0] sm:$0xff]
        %v268 = vld [vmem:[%s204 + $0xf8] sm:$0xff]
        %v269 = vld [vmem:[%s204 + $0x100] sm:$0xff]
        %v270 = vld [vmem:[%s204 + $0x108] sm:$0xff]
        %v271 = vld [vmem:[%s204 + $0x110] sm:$0xff]
        %v272 = vld [vmem:[%s204 + $0x118] sm:$0xff]
        %v273 = vld [vmem:[%s204 + $0x120] sm:$0xff]
        %v274 = vld [vmem:[%s204 + $0x128] sm:$0xff]
        %v275 = vld [vmem:[%s204 + $0x130] sm:$0xff]
        %v276 = vld [vmem:[%s204 + $0x138] sm:$0xff]
        %v277 = vld [vmem:[%s204 + $0x140] sm:$0xff]
        %v278 = vld [vmem:[%s204 + $0x148] sm:$0xff]
        %v279 = vld [vmem:[%s204 + $0x150] sm:$0xff]
        %v280 = vld [vmem:[%s204 + $0x158] sm:$0xff]
        %v281 = vld [vmem:[%s204 + $0x160] sm:$0xff]
        %v282 = vld [vmem:[%s204 + $0x168] sm:$0xff]
        %v283 = vld [vmem:[%s204 + $0x170] sm:$0xff]
        %v284 = vld [vmem:[%s204 + $0x178] sm:$0xff]
        %v285 = vld [vmem:[%s204 + $0x180] sm:$0xff]
        %v286 = vld [vmem:[%s204 + $0x188] sm:$0xff]
        %v287 = vld [vmem:[%s204 + $0x190] sm:$0xff]
        %v288 = vld [vmem:[%s204 + $0x198] sm:$0xff]
        %v289 = vld [vmem:[%s204 + $0x1a0] sm:$0xff]
        %v290 = vld [vmem:[%s204 + $0x1a8] sm:$0xff]
        %v291 = vld [vmem:[%s204 + $0x1b0] sm:$0xff]
        %v292 = vld [vmem:[%s204 + $0x1b8] sm:$0xff]
        %v293 = vld [vmem:[%s204 + $0x1c0] sm:$0xff]
        %v294 = vld [vmem:[%s204 + $0x1c8] sm:$0xff]
        %v295 = vld [vmem:[%s204 + $0x1d0] sm:$0xff]
        %v296 = vld [vmem:[%s204 + $0x1d8] sm:$0xff]
        %v297 = vld [vmem:[%s204 + $0x1e0] sm:$0xff]
        %v298 = vld [vmem:[%s204 + $0x1e8] sm:$0xff]
        %v299 = vld [vmem:[%s204 + $0x1f0] sm:$0xff]
        %v300 = vld [vmem:[%s204 + $0x1f8] sm:$0xff]
        %v301 = vld [vmem:[%s204 + $0x200] sm:$0xff]
        %v302 = vld [vmem:[%s204 + $0x208] sm:$0xff]
        %v303 = vld [vmem:[%s204 + $0x210] sm:$0xff]
        %v304 = vld [vmem:[%s204 + $0x218] sm:$0xff]
        %v305 = vld [vmem:[%s204 + $0x220] sm:$0xff]
        %v306 = vld [vmem:[%s204 + $0x228] sm:$0xff]
        %v307 = vld [vmem:[%s204 + $0x230] sm:$0xff]
        %v308 = vld [vmem:[%s204 + $0x238] sm:$0xff]
        %v309 = vld [vmem:[%s204 + $0x240] sm:$0xff]
        %v310 = vld [vmem:[%s204 + $0x248] sm:$0xff]
        %v311 = vld [vmem:[%s204 + $0x250] sm:$0xff]
        %v312 = vld [vmem:[%s204 + $0x258] sm:$0xff]
        %v313 = vld [vmem:[%s204 + $0x260] sm:$0xff]
        %v314 = vld [vmem:[%s204 + $0x268] sm:$0xff]
        %v315 = vld [vmem:[%s204 + $0x270] sm:$0xff]
        %v316 = vld [vmem:[%s204 + $0x278] sm:$0xff]
        %v317 = vld [vmem:[%s204 + $0x280] sm:$0xff]
        %v318 = vld [vmem:[%s204 + $0x288] sm:$0xff]
        %v319 = vld [vmem:[%s204 + $0x290] sm:$0xff]
        %v320 = vld [vmem:[%s204 + $0x298] sm:$0xff]
        %v321 = vld [vmem:[%s204 + $0x2a0] sm:$0xff]
        %v322 = vld [vmem:[%s204 + $0x2a8] sm:$0xff]
        %v323 = vld [vmem:[%s204 + $0x2b0] sm:$0xff]
        %v324 = vld [vmem:[%s204 + $0x2b8] sm:$0xff]
        %v325 = vld [vmem:[%s204 + $0x2c0] sm:$0xff]
        %v326 = vld [vmem:[%s204 + $0x2c8] sm:$0xff]
        %v327 = vld [vmem:[%s204 + $0x2d0] sm:$0xff]
        %v328 = vld [vmem:[%s204 + $0x2d8] sm:$0xff]
        %v329 = vld [vmem:[%s204 + $0x2e0] sm:$0xff]
        %v330 = vld [vmem:[%s204 + $0x2e8] sm:$0xff]
        %v331 = vld [vmem:[%s204 + $0x2f0] sm:$0xff]
        %v332 = vld [vmem:[%s204 + $0x2f8] sm:$0xff]
        %v333 = vld [vmem:[%s204 + $0x300] sm:$0xff]
        %v334 = vld [vmem:[%s204 + $0x308] sm:$0xff]
        %v335 = vld [vmem:[%s204 + $0x310] sm:$0xff]
        %v336 = vld [vmem:[%s204 + $0x318] sm:$0xff]
        %v337 = vld [vmem:[%s204 + $0x320] sm:$0xff]
        %v338 = vld [vmem:[%s204 + $0x328] sm:$0xff]
        %v339 = vld [vmem:[%s204 + $0x330] sm:$0xff]
        %v340 = vld [vmem:[%s204 + $0x338] sm:$0xff]
        %v341 = vld [vmem:[%s204 + $0x340] sm:$0xff]
        %v342 = vld [vmem:[%s204 + $0x348] sm:$0xff]
        %v343 = vld [vmem:[%s204 + $0x350] sm:$0xff]
        %v344 = vld [vmem:[%s204 + $0x358] sm:$0xff]
        %v345 = vld [vmem:[%s204 + $0x360] sm:$0xff]
        %v346 = vld [vmem:[%s204 + $0x368] sm:$0xff]
        %v347 = vld [vmem:[%s204 + $0x370] sm:$0xff]
        %v348 = vld [vmem:[%s204 + $0x378] sm:$0xff]
        %v349 = vld [vmem:[%s204 + $0x380] sm:$0xff]
        %v350 = vld [vmem:[%s204 + $0x388] sm:$0xff]
        %v351 = vld [vmem:[%s204 + $0x390] sm:$0xff]
        %v352 = vld [vmem:[%s204 + $0x398] sm:$0xff]
        %v353 = vld [vmem:[%s204 + $0x3a0] sm:$0xff]
        %v354 = vld [vmem:[%s204 + $0x3a8] sm:$0xff]
        %v355 = vld [vmem:[%s204 + $0x3b0] sm:$0xff]
        %v356 = vld [vmem:[%s204 + $0x3b8] sm:$0xff]
        %v357 = vld [vmem:[%s204 + $0x3c0] sm:$0xff]
        %v358 = vld [vmem:[%s204 + $0x3c8] sm:$0xff]
        %v359 = vld [vmem:[%s204 + $0x3d0] sm:$0xff]
        %v360 = vld [vmem:[%s204 + $0x3d8] sm:$0xff]
        %v361 = vld [vmem:[%s204 + $0x3e0] sm:$0xff]
        %v362 = vld [vmem:[%s204 + $0x3e8] sm:$0xff]
        %v363 = vld [vmem:[%s204 + $0x3f0] sm:$0xff]
        %v364 = vld [vmem:[%s204 + $0x3f8] sm:$0xff]
        %v365 = vld [vmem:[#allocation5] sm:$0xff]
        %v366 = vld [vmem:[#allocation5 + $0x8] sm:$0xff]
        %v367 = vld [vmem:[#allocation5 + $0x10] sm:$0xff]
        %v368 = vld [vmem:[#allocation5 + $0x18] sm:$0xff]
        %v369 = vld [vmem:[#allocation5 + $0x20] sm:$0xff]
        %v370 = vld [vmem:[#allocation5 + $0x28] sm:$0xff]
        %v371 = vld [vmem:[#allocation5 + $0x30] sm:$0xff]
        %v372 = vld [vmem:[#allocation5 + $0x38] sm:$0xff]
        %v373 = vld [vmem:[#allocation5 + $0x40] sm:$0xff]
        %v374 = vld [vmem:[#allocation5 + $0x48] sm:$0xff]
        %v375 = vld [vmem:[#allocation5 + $0x50] sm:$0xff]
        %v376 = vld [vmem:[#allocation5 + $0x58] sm:$0xff]
        %v377 = vld [vmem:[#allocation5 + $0x60] sm:$0xff]
        %v378 = vld [vmem:[#allocation5 + $0x68] sm:$0xff]
        %v379 = vld [vmem:[#allocation5 + $0x70] sm:$0xff]
        %v380 = vld [vmem:[#allocation5 + $0x78] sm:$0xff]
        %v381 = vld [vmem:[#allocation5 + $0x80] sm:$0xff]
        %v382 = vld [vmem:[#allocation5 + $0x88] sm:$0xff]
        %v383 = vld [vmem:[#allocation5 + $0x90] sm:$0xff]
        %v384 = vld [vmem:[#allocation5 + $0x98] sm:$0xff]
        %v385 = vld [vmem:[#allocation5 + $0xa0] sm:$0xff]
        %v386 = vld [vmem:[#allocation5 + $0xa8] sm:$0xff]
        %v387 = vld [vmem:[#allocation5 + $0xb0] sm:$0xff]
        %v388 = vld [vmem:[#allocation5 + $0xb8] sm:$0xff]
        %v389 = vld [vmem:[#allocation5 + $0xc0] sm:$0xff]
        %v390 = vld [vmem:[#allocation5 + $0xc8] sm:$0xff]
        %v391 = vld [vmem:[#allocation5 + $0xd0] sm:$0xff]
        %v392 = vld [vmem:[#allocation5 + $0xd8] sm:$0xff]
        %v393 = vld [vmem:[#allocation5 + $0xe0] sm:$0xff]
        %v394 = vld [vmem:[#allocation5 + $0xe8] sm:$0xff]
        %v395 = vld [vmem:[#allocation5 + $0xf0] sm:$0xff]
        %v396 = vld [vmem:[#allocation5 + $0xf8] sm:$0xff]
        %v397 = vld [vmem:[#allocation5 + $0x100] sm:$0xff]
        %v398 = vld [vmem:[#allocation5 + $0x108] sm:$0xff]
        %v399 = vld [vmem:[#allocation5 + $0x110] sm:$0xff]
        %v400 = vld [vmem:[#allocation5 + $0x118] sm:$0xff]
        %v401 = vld [vmem:[#allocation5 + $0x120] sm:$0xff]
        %v402 = vld [vmem:[#allocation5 + $0x128] sm:$0xff]
        %v403 = vld [vmem:[#allocation5 + $0x130] sm:$0xff]
        %v404 = vld [vmem:[#allocation5 + $0x138] sm:$0xff]
        %v405 = vld [vmem:[#allocation5 + $0x140] sm:$0xff]
        %v406 = vld [vmem:[#allocation5 + $0x148] sm:$0xff]
        %v407 = vld [vmem:[#allocation5 + $0x150] sm:$0xff]
        %v408 = vld [vmem:[#allocation5 + $0x158] sm:$0xff]
        %v409 = vld [vmem:[#allocation5 + $0x160] sm:$0xff]
        %v410 = vld [vmem:[#allocation5 + $0x168] sm:$0xff]
        %v411 = vld [vmem:[#allocation5 + $0x170] sm:$0xff]
        %v412 = vld [vmem:[#allocation5 + $0x178] sm:$0xff]
        %v413 = vld [vmem:[#allocation5 + $0x180] sm:$0xff]
        %v414 = vld [vmem:[#allocation5 + $0x188] sm:$0xff]
        %v415 = vld [vmem:[#allocation5 + $0x190] sm:$0xff]
        %v416 = vld [vmem:[#allocation5 + $0x198] sm:$0xff]
        %v417 = vld [vmem:[#allocation5 + $0x1a0] sm:$0xff]
        %v418 = vld [vmem:[#allocation5 + $0x1a8] sm:$0xff]
        %v419 = vld [vmem:[#allocation5 + $0x1b0] sm:$0xff]
        %v420 = vld [vmem:[#allocation5 + $0x1b8] sm:$0xff]
        %v421 = vld [vmem:[#allocation5 + $0x1c0] sm:$0xff]
        %v422 = vld [vmem:[#allocation5 + $0x1c8] sm:$0xff]
        %v423 = vld [vmem:[#allocation5 + $0x1d0] sm:$0xff]
        %v424 = vld [vmem:[#allocation5 + $0x1d8] sm:$0xff]
        %v425 = vld [vmem:[#allocation5 + $0x1e0] sm:$0xff]
        %v426 = vld [vmem:[#allocation5 + $0x1e8] sm:$0xff]
        %v427 = vld [vmem:[#allocation5 + $0x1f0] sm:$0xff]
        %v428 = vld [vmem:[#allocation5 + $0x1f8] sm:$0xff]
        %v429 = vld [vmem:[#allocation5 + $0x200] sm:$0xff]
        %v430 = vld [vmem:[#allocation5 + $0x208] sm:$0xff]
        %v431 = vld [vmem:[#allocation5 + $0x210] sm:$0xff]
        %v432 = vld [vmem:[#allocation5 + $0x218] sm:$0xff]
        %v433 = vld [vmem:[#allocation5 + $0x220] sm:$0xff]
        %v434 = vld [vmem:[#allocation5 + $0x228] sm:$0xff]
        %v435 = vld [vmem:[#allocation5 + $0x230] sm:$0xff]
        %v436 = vld [vmem:[#allocation5 + $0x238] sm:$0xff]
        %v437 = vld [vmem:[#allocation5 + $0x240] sm:$0xff]
        %v438 = vld [vmem:[#allocation5 + $0x248] sm:$0xff]
        %v439 = vld [vmem:[#allocation5 + $0x250] sm:$0xff]
        %v440 = vld [vmem:[#allocation5 + $0x258] sm:$0xff]
        %v441 = vld [vmem:[#allocation5 + $0x260] sm:$0xff]
        %v442 = vld [vmem:[#allocation5 + $0x268] sm:$0xff]
        %v443 = vld [vmem:[#allocation5 + $0x270] sm:$0xff]
        %v444 = vld [vmem:[#allocation5 + $0x278] sm:$0xff]
        %v445 = vld [vmem:[#allocation5 + $0x280] sm:$0xff]
        %v446 = vld [vmem:[#allocation5 + $0x288] sm:$0xff]
        %v447 = vld [vmem:[#allocation5 + $0x290] sm:$0xff]
        %v448 = vld [vmem:[#allocation5 + $0x298] sm:$0xff]
        %v449 = vld [vmem:[#allocation5 + $0x2a0] sm:$0xff]
        %v450 = vld [vmem:[#allocation5 + $0x2a8] sm:$0xff]
        %v451 = vld [vmem:[#allocation5 + $0x2b0] sm:$0xff]
        %v452 = vld [vmem:[#allocation5 + $0x2b8] sm:$0xff]
        %v453 = vld [vmem:[#allocation5 + $0x2c0] sm:$0xff]
        %v454 = vld [vmem:[#allocation5 + $0x2c8] sm:$0xff]
        %v455 = vld [vmem:[#allocation5 + $0x2d0] sm:$0xff]
        %v456 = vld [vmem:[#allocation5 + $0x2d8] sm:$0xff]
        %v457 = vld [vmem:[#allocation5 + $0x2e0] sm:$0xff]
        %v458 = vld [vmem:[#allocation5 + $0x2e8] sm:$0xff]
        %v459 = vld [vmem:[#allocation5 + $0x2f0] sm:$0xff]
        %v460 = vld [vmem:[#allocation5 + $0x2f8] sm:$0xff]
        %v461 = vld [vmem:[#allocation5 + $0x300] sm:$0xff]
        %v462 = vld [vmem:[#allocation5 + $0x308] sm:$0xff]
        %v463 = vld [vmem:[#allocation5 + $0x310] sm:$0xff]
        %v464 = vld [vmem:[#allocation5 + $0x318] sm:$0xff]
        %v465 = vld [vmem:[#allocation5 + $0x320] sm:$0xff]
        %v466 = vld [vmem:[#allocation5 + $0x328] sm:$0xff]
        %v467 = vld [vmem:[#allocation5 + $0x330] sm:$0xff]
        %v468 = vld [vmem:[#allocation5 + $0x338] sm:$0xff]
        %v469 = vld [vmem:[#allocation5 + $0x340] sm:$0xff]
        %v470 = vld [vmem:[#allocation5 + $0x348] sm:$0xff]
        %v471 = vld [vmem:[#allocation5 + $0x350] sm:$0xff]
        %v472 = vld [vmem:[#allocation5 + $0x358] sm:$0xff]
        %v473 = vld [vmem:[#allocation5 + $0x360] sm:$0xff]
        %v474 = vld [vmem:[#allocation5 + $0x368] sm:$0xff]
        %v475 = vld [vmem:[#allocation5 + $0x370] sm:$0xff]
        %v476 = vld [vmem:[#allocation5 + $0x378] sm:$0xff]
        %v477 = vld [vmem:[#allocation5 + $0x380] sm:$0xff]
        %v478 = vld [vmem:[#allocation5 + $0x388] sm:$0xff]
        %v479 = vld [vmem:[#allocation5 + $0x390] sm:$0xff]
        %v480 = vld [vmem:[#allocation5 + $0x398] sm:$0xff]
        %v481 = vld [vmem:[#allocation5 + $0x3a0] sm:$0xff]
        %v482 = vld [vmem:[#allocation5 + $0x3a8] sm:$0xff]
        %v483 = vld [vmem:[#allocation5 + $0x3b0] sm:$0xff]
        %v484 = vld [vmem:[#allocation5 + $0x3b8] sm:$0xff]
        %v485 = vld [vmem:[#allocation5 + $0x3c0] sm:$0xff]
        %v486 = vld [vmem:[#allocation5 + $0x3c8] sm:$0xff]
        %v487 = vld [vmem:[#allocation5 + $0x3d0] sm:$0xff]
        %v488 = vld [vmem:[#allocation5 + $0x3d8] sm:$0xff]
        %v489 = vld [vmem:[#allocation5 + $0x3e0] sm:$0xff]
        %v490 = vld [vmem:[#allocation5 + $0x3e8] sm:$0xff]
        %v491 = vld [vmem:[#allocation5 + $0x3f0] sm:$0xff]
        %v492 = vld [vmem:[#allocation5 + $0x3f8] sm:$0xff]
        %v493 = vld [vmem:[#allocation5 + $0x400] sm:$0xff]
        %v494 = vld [vmem:[#allocation5 + $0x408] sm:$0xff]
        %v495 = vld [vmem:[#allocation5 + $0x410] sm:$0xff]
        %v496 = vld [vmem:[#allocation5 + $0x418] sm:$0xff]
        %v497 = vld [vmem:[#allocation5 + $0x420] sm:$0xff]
        %v498 = vld [vmem:[#allocation5 + $0x428] sm:$0xff]
        %v499 = vld [vmem:[#allocation5 + $0x430] sm:$0xff]
        %v500 = vld [vmem:[#allocation5 + $0x438] sm:$0xff]
        %v501 = vld [vmem:[#allocation5 + $0x440] sm:$0xff]
        %v502 = vld [vmem:[#allocation5 + $0x448] sm:$0xff]
        %v503 = vld [vmem:[#allocation5 + $0x450] sm:$0xff]
        %v504 = vld [vmem:[#allocation5 + $0x458] sm:$0xff]
        %v505 = vld [vmem:[#allocation5 + $0x460] sm:$0xff]
        %v506 = vld [vmem:[#allocation5 + $0x468] sm:$0xff]
        %v507 = vld [vmem:[#allocation5 + $0x470] sm:$0xff]
        %v508 = vld [vmem:[#allocation5 + $0x478] sm:$0xff]
        %v509 = vld [vmem:[#allocation5 + $0x480] sm:$0xff]
        %v510 = vld [vmem:[#allocation5 + $0x488] sm:$0xff]
        %v511 = vld [vmem:[#allocation5 + $0x490] sm:$0xff]
        %v512 = vld [vmem:[#allocation5 + $0x498] sm:$0xff]
        %v513 = vld [vmem:[#allocation5 + $0x4a0] sm:$0xff]
        %v514 = vld [vmem:[#allocation5 + $0x4a8] sm:$0xff]
        %v515 = vld [vmem:[#allocation5 + $0x4b0] sm:$0xff]
        %v516 = vld [vmem:[#allocation5 + $0x4b8] sm:$0xff]
        %v517 = vld [vmem:[#allocation5 + $0x4c0] sm:$0xff]
        %v518 = vld [vmem:[#allocation5 + $0x4c8] sm:$0xff]
        %v519 = vld [vmem:[#allocation5 + $0x4d0] sm:$0xff]
        %v520 = vld [vmem:[#allocation5 + $0x4d8] sm:$0xff]
        %v521 = vld [vmem:[#allocation5 + $0x4e0] sm:$0xff]
        %v522 = vld [vmem:[#allocation5 + $0x4e8] sm:$0xff]
        %v523 = vld [vmem:[#allocation5 + $0x4f0] sm:$0xff]
        %v524 = vld [vmem:[#allocation5 + $0x4f8] sm:$0xff]
        %v525 = vld [vmem:[#allocation5 + $0x500] sm:$0xff]
        %v526 = vld [vmem:[#allocation5 + $0x508] sm:$0xff]
        %v527 = vld [vmem:[#allocation5 + $0x510] sm:$0xff]
        %v528 = vld [vmem:[#allocation5 + $0x518] sm:$0xff]
        %v529 = vld [vmem:[#allocation5 + $0x520] sm:$0xff]
        %v530 = vld [vmem:[#allocation5 + $0x528] sm:$0xff]
        %v531 = vld [vmem:[#allocation5 + $0x530] sm:$0xff]
        %v532 = vld [vmem:[#allocation5 + $0x538] sm:$0xff]
        %v533 = vld [vmem:[#allocation5 + $0x540] sm:$0xff]
        %v534 = vld [vmem:[#allocation5 + $0x548] sm:$0xff]
        %v535 = vld [vmem:[#allocation5 + $0x550] sm:$0xff]
        %v536 = vld [vmem:[#allocation5 + $0x558] sm:$0xff]
        %v537 = vld [vmem:[#allocation5 + $0x560] sm:$0xff]
        %v538 = vld [vmem:[#allocation5 + $0x568] sm:$0xff]
        %v539 = vld [vmem:[#allocation5 + $0x570] sm:$0xff]
        %v540 = vld [vmem:[#allocation5 + $0x578] sm:$0xff]
        %v541 = vld [vmem:[#allocation5 + $0x580] sm:$0xff]
        %v542 = vld [vmem:[#allocation5 + $0x588] sm:$0xff]
        %v543 = vld [vmem:[#allocation5 + $0x590] sm:$0xff]
        %v544 = vld [vmem:[#allocation5 + $0x598] sm:$0xff]
        %v545 = vld [vmem:[#allocation5 + $0x5a0] sm:$0xff]
        %v546 = vld [vmem:[#allocation5 + $0x5a8] sm:$0xff]
        %v547 = vld [vmem:[#allocation5 + $0x5b0] sm:$0xff]
        %v548 = vld [vmem:[#allocation5 + $0x5b8] sm:$0xff]
        %v549 = vld [vmem:[#allocation5 + $0x5c0] sm:$0xff]
        %v550 = vld [vmem:[#allocation5 + $0x5c8] sm:$0xff]
        %v551 = vld [vmem:[#allocation5 + $0x5d0] sm:$0xff]
        %v552 = vld [vmem:[#allocation5 + $0x5d8] sm:$0xff]
        %v553 = vld [vmem:[#allocation5 + $0x5e0] sm:$0xff]
        %v554 = vld [vmem:[#allocation5 + $0x5e8] sm:$0xff]
        %v555 = vld [vmem:[#allocation5 + $0x5f0] sm:$0xff]
        %v556 = vld [vmem:[#allocation5 + $0x5f8] sm:$0xff]
        %v557 = vld [vmem:[#allocation7] sm:$0x3f]
        %v559 = vlaneseq
        %v560 = vshrl.u32 %v559, 7
        %v561 = vsub.s32 0, %v560
        %v562 = vrot.slane %v557, %v561
        %v563 = vlaneseq
        %v564 = vshrl.u32 %v563, 7
        %v565 = vsub.s32 1, %v564
        %v566 = vrot.slane %v557, %v565
        %v567 = vlaneseq
        %v568 = vshrl.u32 %v567, 7
        %v569 = vsub.s32 2, %v568
        %v570 = vrot.slane %v557, %v569
        %v571 = vlaneseq
        %v572 = vshrl.u32 %v571, 7
        %v573 = vsub.s32 3, %v572
        %v574 = vrot.slane %v557, %v573
        %v575 = vlaneseq
        %v576 = vshrl.u32 %v575, 7
        %v577 = vsub.s32 4, %v576
        %v578 = vrot.slane %v557, %v577
        %v579 = vlaneseq
        %v580 = vshrl.u32 %v579, 7
        %v581 = vsub.s32 5, %v580
        %v582 = vrot.slane %v557, %v581
        %589 = vmatprep.subr.mxu0 %v456
        %590 = vmatpush1.msra.mxu0 %v455
        %591 = vmatprep.subr.mxu0 %v450
        %592 = vmatpush1.msra.mxu0 %v449
        %593 = vmatprep.subr.mxu0 %v444
        %594 = vmatpush1.msra.mxu0 %v443
        %595 = vmatprep.subr.mxu0 %v438
        %596 = vmatpush1.msra.mxu0 %v437
        %597 = vmatprep.subr.mxu0 %v432
        %598 = vmatpush1.msra.mxu0 %v431
        %599 = vmatprep.subr.mxu0 %v426
        %600 = vmatpush1.msra.mxu0 %v425
        %601 = vmatprep.subr.mxu0 %v420
        %602 = vmatpush1.msra.mxu0 %v419
        %603 = vmatprep.subr.mxu0 %v414
        %604 = vmatpush1.msra.mxu0 %v413
        %605 = vmatprep.subr.mxu0 %v408
        %606 = vmatpush1.msra.mxu0 %v407
        %607 = vmatprep.subr.mxu0 %v402
        %608 = vmatpush1.msra.mxu0 %v401
        %609 = vmatprep.subr.mxu0 %v396
        %610 = vmatpush1.msra.mxu0 %v395
        %611 = vmatprep.subr.mxu0 %v390
        %612 = vmatpush1.msra.mxu0 %v389
        %613 = vmatprep.subr.mxu0 %v384
        %614 = vmatpush1.msra.mxu0 %v383
        %615 = vmatprep.subr.mxu0 %v378
        %616 = vmatpush1.msra.mxu0 %v377
        %617 = vmatprep.subr.mxu0 %v372
        %618 = vmatpush1.msra.mxu0 %v371
        %619 = vmatprep.subr.mxu0 %v366
        %620 = vmatpush1.msra.mxu0 %v365
        %621 = vmatprep.subr.mxu0 %v552
        %622 = vmatpush2.msra.mxu0 %v551
        %623 = vmatprep.subr.mxu0 %v546
        %624 = vmatpush2.msra.mxu0 %v545
        %625 = vmatprep.subr.mxu0 %v540
        %626 = vmatpush2.msra.mxu0 %v539
        %627 = vmatprep.subr.mxu0 %v534
        %628 = vmatpush2.msra.mxu0 %v533
        %629 = vmatprep.subr.mxu0 %v528
        %630 = vmatpush2.msra.mxu0 %v527
        %631 = vmatprep.subr.mxu0 %v522
        %632 = vmatpush2.msra.mxu0 %v521
        %633 = vmatprep.subr.mxu0 %v516
        %634 = vmatpush2.msra.mxu0 %v515
        %635 = vmatprep.subr.mxu0 %v510
        %636 = vmatpush2.msra.mxu0 %v509
        %637 = vmatprep.subr.mxu0 %v504
        %638 = vmatpush2.msra.mxu0 %v503
        %639 = vmatprep.subr.mxu0 %v498
        %640 = vmatpush2.msra.mxu0 %v497
        %641 = vmatprep.subr.mxu0 %v492
        %642 = vmatpush2.msra.mxu0 %v491
        %643 = vmatprep.subr.mxu0 %v486
        %644 = vmatpush2.msra.mxu0 %v485
        %645 = vmatprep.subr.mxu0 %v480
        %646 = vmatpush2.msra.mxu0 %v479
        %647 = vmatprep.subr.mxu0 %v474
        %648 = vmatpush2.msra.mxu0 %v473
        %649 = vmatprep.subr.mxu0 %v468
        %650 = vmatpush2.msra.mxu0 %v467
        %651 = vmatprep.subr.mxu0 %v462
        %652 = vmatpush2.msra.mxu0 %v461
        %653 = vmatprep.mubr.f32.mxu0 %v238
        %654 = vmatmul.mubr.f32.gmra.mxu0 %v237
        %v655 = vpop.f32.mrf.mxu0
        %v656 = vadd.f32 %v562, %v655
        %v657 = vpop.f32.mrf.mxu0
        %v658 = vadd.f32 %v566, %v657
        %659 = vmatprep.mubr.f32.mxu0 %v240
        %660 = vmatmul.mubr.f32.gmra.mxu0 %v239
        %v661 = vpop.f32.mrf.mxu0
        %v662 = vadd.f32 %v562, %v661
        %v663 = vpop.f32.mrf.mxu0
        %v664 = vadd.f32 %v566, %v663
        %665 = vmatprep.mubr.f32.mxu0 %v242
        %666 = vmatmul.mubr.f32.gmra.mxu0 %v241
        %v667 = vpop.f32.mrf.mxu0
        %v668 = vadd.f32 %v562, %v667
        %v669 = vpop.f32.mrf.mxu0
        %v670 = vadd.f32 %v566, %v669
        %671 = vmatprep.mubr.f32.mxu0 %v244
        %672 = vmatmul.mubr.f32.gmra.mxu0 %v243
        %v673 = vpop.f32.mrf.mxu0
        %v674 = vadd.f32 %v562, %v673
        %v675 = vpop.f32.mrf.mxu0
        %v676 = vadd.f32 %v566, %v675
        %677 = vmatprep.mubr.f32.mxu0 %v246
        %678 = vmatmul.mubr.f32.gmra.mxu0 %v245
        %v679 = vpop.f32.mrf.mxu0
        %v680 = vadd.f32 %v562, %v679
        %v681 = vpop.f32.mrf.mxu0
        %v682 = vadd.f32 %v566, %v681
        %683 = vmatprep.mubr.f32.mxu0 %v248
        %684 = vmatmul.mubr.f32.gmra.mxu0 %v247
        %v685 = vpop.f32.mrf.mxu0
        %v686 = vadd.f32 %v562, %v685
        %v687 = vpop.f32.mrf.mxu0
        %v688 = vadd.f32 %v566, %v687
        %689 = vmatprep.mubr.f32.mxu0 %v250
        %690 = vmatmul.mubr.f32.gmra.mxu0 %v249
        %v691 = vpop.f32.mrf.mxu0
        %v692 = vadd.f32 %v562, %v691
        %v693 = vpop.f32.mrf.mxu0
        %v694 = vadd.f32 %v566, %v693
        %695 = vmatprep.mubr.f32.mxu0 %v252
        %696 = vmatmul.mubr.f32.gmra.mxu0 %v251
        %v697 = vpop.f32.mrf.mxu0
        %v698 = vadd.f32 %v562, %v697
        %v699 = vpop.f32.mrf.mxu0
        %v700 = vadd.f32 %v566, %v699
        %701 = vmatprep.mubr.f32.mxu0 %v254
        %702 = vmatmul.mubr.f32.gmra.mxu0 %v253
        %v703 = vpop.f32.mrf.mxu0
        %v704 = vadd.f32 %v562, %v703
        %v705 = vpop.f32.mrf.mxu0
        %v706 = vadd.f32 %v566, %v705
        %707 = vmatprep.mubr.f32.mxu0 %v256
        %708 = vmatmul.mubr.f32.gmra.mxu0 %v255
        %v709 = vpop.f32.mrf.mxu0
        %v710 = vadd.f32 %v562, %v709
        %v711 = vpop.f32.mrf.mxu0
        %v712 = vadd.f32 %v566, %v711
        %713 = vmatprep.mubr.f32.mxu0 %v258
        %714 = vmatmul.mubr.f32.gmra.mxu0 %v257
        %v715 = vpop.f32.mrf.mxu0
        %v716 = vadd.f32 %v562, %v715
        %v717 = vpop.f32.mrf.mxu0
        %v718 = vadd.f32 %v566, %v717
        %719 = vmatprep.mubr.f32.mxu0 %v260
        %720 = vmatmul.mubr.f32.gmra.mxu0 %v259
        %v721 = vpop.f32.mrf.mxu0
        %v722 = vadd.f32 %v562, %v721
        %v723 = vpop.f32.mrf.mxu0
        %v724 = vadd.f32 %v566, %v723
        %725 = vmatprep.mubr.f32.mxu0 %v262
        %726 = vmatmul.mubr.f32.gmra.mxu0 %v261
        %v727 = vpop.f32.mrf.mxu0
        %v728 = vadd.f32 %v562, %v727
        %v729 = vpop.f32.mrf.mxu0
        %v730 = vadd.f32 %v566, %v729
        %731 = vmatprep.mubr.f32.mxu0 %v264
        %732 = vmatmul.mubr.f32.gmra.mxu0 %v263
        %v733 = vpop.f32.mrf.mxu0
        %v734 = vadd.f32 %v562, %v733
        %v735 = vpop.f32.mrf.mxu0
        %v736 = vadd.f32 %v566, %v735
        %737 = vmatprep.mubr.f32.mxu0 %v266
        %738 = vmatmul.mubr.f32.gmra.mxu0 %v265
        %v739 = vpop.f32.mrf.mxu0
        %v740 = vadd.f32 %v562, %v739
        %v741 = vpop.f32.mrf.mxu0
        %v742 = vadd.f32 %v566, %v741
        %743 = vmatprep.mubr.f32.mxu0 %v268
        %744 = vmatmul.mubr.f32.gmra.mxu0 %v267
        %v745 = vpop.f32.mrf.mxu0
        %v746 = vadd.f32 %v562, %v745
        %v747 = vpop.f32.mrf.mxu0
        %v748 = vadd.f32 %v566, %v747
        %749 = vmatprep.mubr.f32.mxu0 %v270
        %750 = vmatmul.mubr.f32.gmra.mxu0 %v269
        %v751 = vpop.f32.mrf.mxu0
        %v752 = vadd.f32 %v562, %v751
        %v753 = vpop.f32.mrf.mxu0
        %v754 = vadd.f32 %v566, %v753
        %755 = vmatprep.mubr.f32.mxu0 %v272
        %756 = vmatmul.mubr.f32.gmra.mxu0 %v271
        %v757 = vpop.f32.mrf.mxu0
        %v758 = vadd.f32 %v562, %v757
        %v759 = vpop.f32.mrf.mxu0
        %v760 = vadd.f32 %v566, %v759
        %761 = vmatprep.mubr.f32.mxu0 %v274
        %762 = vmatmul.mubr.f32.gmra.mxu0 %v273
        %v763 = vpop.f32.mrf.mxu0
        %v764 = vadd.f32 %v562, %v763
        %v765 = vpop.f32.mrf.mxu0
        %v766 = vadd.f32 %v566, %v765
        %767 = vmatprep.mubr.f32.mxu0 %v276
        %768 = vmatmul.mubr.f32.gmra.mxu0 %v275
        %v769 = vpop.f32.mrf.mxu0
        %v770 = vadd.f32 %v562, %v769
        %v771 = vpop.f32.mrf.mxu0
        %v772 = vadd.f32 %v566, %v771
        %773 = vmatprep.mubr.f32.mxu0 %v278
        %774 = vmatmul.mubr.f32.gmra.mxu0 %v277
        %v775 = vpop.f32.mrf.mxu0
        %v776 = vadd.f32 %v562, %v775
        %v777 = vpop.f32.mrf.mxu0
        %v778 = vadd.f32 %v566, %v777
        %779 = vmatprep.mubr.f32.mxu0 %v280
        %780 = vmatmul.mubr.f32.gmra.mxu0 %v279
        %v781 = vpop.f32.mrf.mxu0
        %v782 = vadd.f32 %v562, %v781
        %v783 = vpop.f32.mrf.mxu0
        %v784 = vadd.f32 %v566, %v783
        %785 = vmatprep.mubr.f32.mxu0 %v282
        %786 = vmatmul.mubr.f32.gmra.mxu0 %v281
        %v787 = vpop.f32.mrf.mxu0
        %v788 = vadd.f32 %v562, %v787
        %v789 = vpop.f32.mrf.mxu0
        %v790 = vadd.f32 %v566, %v789
        %791 = vmatprep.mubr.f32.mxu0 %v284
        %792 = vmatmul.mubr.f32.gmra.mxu0 %v283
        %v793 = vpop.f32.mrf.mxu0
        %v794 = vadd.f32 %v562, %v793
        %v795 = vpop.f32.mrf.mxu0
        %v796 = vadd.f32 %v566, %v795
        %797 = vmatprep.mubr.f32.mxu0 %v286
        %798 = vmatmul.mubr.f32.gmra.mxu0 %v285
        %v799 = vpop.f32.mrf.mxu0
        %v800 = vadd.f32 %v562, %v799
        %v801 = vpop.f32.mrf.mxu0
        %v802 = vadd.f32 %v566, %v801
        %803 = vmatprep.mubr.f32.mxu0 %v288
        %804 = vmatmul.mubr.f32.gmra.mxu0 %v287
        %v805 = vpop.f32.mrf.mxu0
        %v806 = vadd.f32 %v562, %v805
        %v807 = vpop.f32.mrf.mxu0
        %v808 = vadd.f32 %v566, %v807
        %809 = vmatprep.mubr.f32.mxu0 %v290
        %810 = vmatmul.mubr.f32.gmra.mxu0 %v289
        %v811 = vpop.f32.mrf.mxu0
        %v812 = vadd.f32 %v562, %v811
        %v813 = vpop.f32.mrf.mxu0
        %v814 = vadd.f32 %v566, %v813
        %815 = vmatprep.mubr.f32.mxu0 %v292
        %816 = vmatmul.mubr.f32.gmra.mxu0 %v291
        %v817 = vpop.f32.mrf.mxu0
        %v818 = vadd.f32 %v562, %v817
        %v819 = vpop.f32.mrf.mxu0
        %v820 = vadd.f32 %v566, %v819
        %821 = vmatprep.mubr.f32.mxu0 %v294
        %822 = vmatmul.mubr.f32.gmra.mxu0 %v293
        %v823 = vpop.f32.mrf.mxu0
        %v824 = vadd.f32 %v562, %v823
        %v825 = vpop.f32.mrf.mxu0
        %v826 = vadd.f32 %v566, %v825
        %827 = vmatprep.mubr.f32.mxu0 %v296
        %828 = vmatmul.mubr.f32.gmra.mxu0 %v295
        %v829 = vpop.f32.mrf.mxu0
        %v830 = vadd.f32 %v562, %v829
        %v831 = vpop.f32.mrf.mxu0
        %v832 = vadd.f32 %v566, %v831
        %833 = vmatprep.mubr.f32.mxu0 %v298
        %834 = vmatmul.mubr.f32.gmra.mxu0 %v297
        %v835 = vpop.f32.mrf.mxu0
        %v836 = vadd.f32 %v562, %v835
        %v837 = vpop.f32.mrf.mxu0
        %v838 = vadd.f32 %v566, %v837
        %839 = vmatprep.mubr.f32.mxu0 %v300
        %840 = vmatmul.mubr.f32.gmra.mxu0 %v299
        %v841 = vpop.f32.mrf.mxu0
        %v842 = vadd.f32 %v562, %v841
        %v843 = vpop.f32.mrf.mxu0
        %v844 = vadd.f32 %v566, %v843
        %845 = vmatprep.mubr.f32.mxu0 %v302
        %846 = vmatmul.mubr.f32.gmra.mxu0 %v301
        %v847 = vpop.f32.mrf.mxu0
        %v848 = vadd.f32 %v562, %v847
        %v849 = vpop.f32.mrf.mxu0
        %v850 = vadd.f32 %v566, %v849
        %851 = vmatprep.mubr.f32.mxu0 %v304
        %852 = vmatmul.mubr.f32.gmra.mxu0 %v303
        %v853 = vpop.f32.mrf.mxu0
        %v854 = vadd.f32 %v562, %v853
        %v855 = vpop.f32.mrf.mxu0
        %v856 = vadd.f32 %v566, %v855
        %857 = vmatprep.mubr.f32.mxu0 %v306
        %858 = vmatmul.mubr.f32.gmra.mxu0 %v305
        %v859 = vpop.f32.mrf.mxu0
        %v860 = vadd.f32 %v562, %v859
        %v861 = vpop.f32.mrf.mxu0
        %v862 = vadd.f32 %v566, %v861
        %863 = vmatprep.mubr.f32.mxu0 %v308
        %864 = vmatmul.mubr.f32.gmra.mxu0 %v307
        %v865 = vpop.f32.mrf.mxu0
        %v866 = vadd.f32 %v562, %v865
        %v867 = vpop.f32.mrf.mxu0
        %v868 = vadd.f32 %v566, %v867
        %869 = vmatprep.mubr.f32.mxu0 %v310
        %870 = vmatmul.mubr.f32.gmra.mxu0 %v309
        %v871 = vpop.f32.mrf.mxu0
        %v872 = vadd.f32 %v562, %v871
        %v873 = vpop.f32.mrf.mxu0
        %v874 = vadd.f32 %v566, %v873
        %875 = vmatprep.mubr.f32.mxu0 %v312
        %876 = vmatmul.mubr.f32.gmra.mxu0 %v311
        %v877 = vpop.f32.mrf.mxu0
        %v878 = vadd.f32 %v562, %v877
        %v879 = vpop.f32.mrf.mxu0
        %v880 = vadd.f32 %v566, %v879
        %881 = vmatprep.mubr.f32.mxu0 %v314
        %882 = vmatmul.mubr.f32.gmra.mxu0 %v313
        %v883 = vpop.f32.mrf.mxu0
        %v884 = vadd.f32 %v562, %v883
        %v885 = vpop.f32.mrf.mxu0
        %v886 = vadd.f32 %v566, %v885
        %887 = vmatprep.mubr.f32.mxu0 %v316
        %888 = vmatmul.mubr.f32.gmra.mxu0 %v315
        %v889 = vpop.f32.mrf.mxu0
        %v890 = vadd.f32 %v562, %v889
        %v891 = vpop.f32.mrf.mxu0
        %v892 = vadd.f32 %v566, %v891
        %893 = vmatprep.mubr.f32.mxu0 %v318
        %894 = vmatmul.mubr.f32.gmra.mxu0 %v317
        %v895 = vpop.f32.mrf.mxu0
        %v896 = vadd.f32 %v562, %v895
        %v897 = vpop.f32.mrf.mxu0
        %v898 = vadd.f32 %v566, %v897
        %899 = vmatprep.mubr.f32.mxu0 %v320
        %900 = vmatmul.mubr.f32.gmra.mxu0 %v319
        %v901 = vpop.f32.mrf.mxu0
        %v902 = vadd.f32 %v562, %v901
        %v903 = vpop.f32.mrf.mxu0
        %v904 = vadd.f32 %v566, %v903
        %905 = vmatprep.mubr.f32.mxu0 %v322
        %906 = vmatmul.mubr.f32.gmra.mxu0 %v321
        %v907 = vpop.f32.mrf.mxu0
        %v908 = vadd.f32 %v562, %v907
        %v909 = vpop.f32.mrf.mxu0
        %v910 = vadd.f32 %v566, %v909
        %911 = vmatprep.mubr.f32.mxu0 %v324
        %912 = vmatmul.mubr.f32.gmra.mxu0 %v323
        %v913 = vpop.f32.mrf.mxu0
        %v914 = vadd.f32 %v562, %v913
        %v915 = vpop.f32.mrf.mxu0
        %v916 = vadd.f32 %v566, %v915
        %917 = vmatprep.mubr.f32.mxu0 %v326
        %918 = vmatmul.mubr.f32.gmra.mxu0 %v325
        %v919 = vpop.f32.mrf.mxu0
        %v920 = vadd.f32 %v562, %v919
        %v921 = vpop.f32.mrf.mxu0
        %v922 = vadd.f32 %v566, %v921
        %923 = vmatprep.mubr.f32.mxu0 %v328
        %924 = vmatmul.mubr.f32.gmra.mxu0 %v327
        %v925 = vpop.f32.mrf.mxu0
        %v926 = vadd.f32 %v562, %v925
        %v927 = vpop.f32.mrf.mxu0
        %v928 = vadd.f32 %v566, %v927
        %929 = vmatprep.mubr.f32.mxu0 %v330
        %930 = vmatmul.mubr.f32.gmra.mxu0 %v329
        %v931 = vpop.f32.mrf.mxu0
        %v932 = vadd.f32 %v562, %v931
        %v933 = vpop.f32.mrf.mxu0
        %v934 = vadd.f32 %v566, %v933
        %935 = vmatprep.mubr.f32.mxu0 %v332
        %936 = vmatmul.mubr.f32.gmra.mxu0 %v331
        %v937 = vpop.f32.mrf.mxu0
        %v938 = vadd.f32 %v562, %v937
        %v939 = vpop.f32.mrf.mxu0
        %v940 = vadd.f32 %v566, %v939
        %941 = vmatprep.mubr.f32.mxu0 %v334
        %942 = vmatmul.mubr.f32.gmra.mxu0 %v333
        %v943 = vpop.f32.mrf.mxu0
        %v944 = vadd.f32 %v562, %v943
        %v945 = vpop.f32.mrf.mxu0
        %v946 = vadd.f32 %v566, %v945
        %947 = vmatprep.mubr.f32.mxu0 %v336
        %948 = vmatmul.mubr.f32.gmra.mxu0 %v335
        %v949 = vpop.f32.mrf.mxu0
        %v950 = vadd.f32 %v562, %v949
        %v951 = vpop.f32.mrf.mxu0
        %v952 = vadd.f32 %v566, %v951
        %953 = vmatprep.mubr.f32.mxu0 %v338
        %954 = vmatmul.mubr.f32.gmra.mxu0 %v337
        %v955 = vpop.f32.mrf.mxu0
        %v956 = vadd.f32 %v562, %v955
        %v957 = vpop.f32.mrf.mxu0
        %v958 = vadd.f32 %v566, %v957
        %959 = vmatprep.mubr.f32.mxu0 %v340
        %960 = vmatmul.mubr.f32.gmra.mxu0 %v339
        %v961 = vpop.f32.mrf.mxu0
        %v962 = vadd.f32 %v562, %v961
        %v963 = vpop.f32.mrf.mxu0
        %v964 = vadd.f32 %v566, %v963
        %965 = vmatprep.mubr.f32.mxu0 %v342
        %966 = vmatmul.mubr.f32.gmra.mxu0 %v341
        %v967 = vpop.f32.mrf.mxu0
        %v968 = vadd.f32 %v562, %v967
        %v969 = vpop.f32.mrf.mxu0
        %v970 = vadd.f32 %v566, %v969
        %971 = vmatprep.mubr.f32.mxu0 %v344
        %972 = vmatmul.mubr.f32.gmra.mxu0 %v343
        %v973 = vpop.f32.mrf.mxu0
        %v974 = vadd.f32 %v562, %v973
        %v975 = vpop.f32.mrf.mxu0
        %v976 = vadd.f32 %v566, %v975
        %977 = vmatprep.mubr.f32.mxu0 %v346
        %978 = vmatmul.mubr.f32.gmra.mxu0 %v345
        %v979 = vpop.f32.mrf.mxu0
        %v980 = vadd.f32 %v562, %v979
        %v981 = vpop.f32.mrf.mxu0
        %v982 = vadd.f32 %v566, %v981
        %983 = vmatprep.mubr.f32.mxu0 %v348
        %984 = vmatmul.mubr.f32.gmra.mxu0 %v347
        %v985 = vpop.f32.mrf.mxu0
        %v986 = vadd.f32 %v562, %v985
        %v987 = vpop.f32.mrf.mxu0
        %v988 = vadd.f32 %v566, %v987
        %989 = vmatprep.mubr.f32.mxu0 %v350
        %990 = vmatmul.mubr.f32.gmra.mxu0 %v349
        %v991 = vpop.f32.mrf.mxu0
        %v992 = vadd.f32 %v562, %v991
        %v993 = vpop.f32.mrf.mxu0
        %v994 = vadd.f32 %v566, %v993
        %995 = vmatprep.mubr.f32.mxu0 %v352
        %996 = vmatmul.mubr.f32.gmra.mxu0 %v351
        %v997 = vpop.f32.mrf.mxu0
        %v998 = vadd.f32 %v562, %v997
        %v999 = vpop.f32.mrf.mxu0
        %v1000 = vadd.f32 %v566, %v999
        %1001 = vmatprep.mubr.f32.mxu0 %v354
        %1002 = vmatmul.mubr.f32.gmra.mxu0 %v353
        %v1003 = vpop.f32.mrf.mxu0
        %v1004 = vadd.f32 %v562, %v1003
        %v1005 = vpop.f32.mrf.mxu0
        %v1006 = vadd.f32 %v566, %v1005
        %1007 = vmatprep.mubr.f32.mxu0 %v356
        %1008 = vmatmul.mubr.f32.gmra.mxu0 %v355
        %v1009 = vpop.f32.mrf.mxu0
        %v1010 = vadd.f32 %v562, %v1009
        %v1011 = vpop.f32.mrf.mxu0
        %v1012 = vadd.f32 %v566, %v1011
        %1013 = vmatprep.mubr.f32.mxu0 %v358
        %1014 = vmatmul.mubr.f32.gmra.mxu0 %v357
        %v1015 = vpop.f32.mrf.mxu0
        %v1016 = vadd.f32 %v562, %v1015
        %v1017 = vpop.f32.mrf.mxu0
        %v1018 = vadd.f32 %v566, %v1017
        %1019 = vmatprep.mubr.f32.mxu0 %v360
        %1020 = vmatmul.mubr.f32.gmra.mxu0 %v359
        %v1021 = vpop.f32.mrf.mxu0
        %v1022 = vadd.f32 %v562, %v1021
        %v1023 = vpop.f32.mrf.mxu0
        %v1024 = vadd.f32 %v566, %v1023
        %1025 = vmatprep.mubr.f32.mxu0 %v362
        %1026 = vmatmul.mubr.f32.gmra.mxu0 %v361
        %v1027 = vpop.f32.mrf.mxu0
        %v1028 = vadd.f32 %v562, %v1027
        %v1029 = vpop.f32.mrf.mxu0
        %v1030 = vadd.f32 %v566, %v1029
        %1031 = vmatprep.mubr.f32.mxu0 %v364
        %1032 = vmatmul.mubr.f32.gmra.mxu0 %v363
        %v1033 = vpop.f32.mrf.mxu0
        %v1034 = vadd.f32 %v562, %v1033
        %v1035 = vpop.f32.mrf.mxu0
        %v1036 = vadd.f32 %v566, %v1035
        %1037 = vdwg.mxu0
        %1038 = vmatprep.subr.mxu0 %v458
        %1039 = vmatpush1.msra.mxu0 %v457
        %1040 = vmatprep.subr.mxu0 %v452
        %1041 = vmatpush1.msra.mxu0 %v451
        %1042 = vmatprep.subr.mxu0 %v446
        %1043 = vmatpush1.msra.mxu0 %v445
        %1044 = vmatprep.subr.mxu0 %v440
        %1045 = vmatpush1.msra.mxu0 %v439
        %1046 = vmatprep.subr.mxu0 %v434
        %1047 = vmatpush1.msra.mxu0 %v433
        %1048 = vmatprep.subr.mxu0 %v428
        %1049 = vmatpush1.msra.mxu0 %v427
        %1050 = vmatprep.subr.mxu0 %v422
        %1051 = vmatpush1.msra.mxu0 %v421
        %1052 = vmatprep.subr.mxu0 %v416
        %1053 = vmatpush1.msra.mxu0 %v415
        %1054 = vmatprep.subr.mxu0 %v410
        %1055 = vmatpush1.msra.mxu0 %v409
        %1056 = vmatprep.subr.mxu0 %v404
        %1057 = vmatpush1.msra.mxu0 %v403
        %1058 = vmatprep.subr.mxu0 %v398
        %1059 = vmatpush1.msra.mxu0 %v397
        %1060 = vmatprep.subr.mxu0 %v392
        %1061 = vmatpush1.msra.mxu0 %v391
        %1062 = vmatprep.subr.mxu0 %v386
        %1063 = vmatpush1.msra.mxu0 %v385
        %1064 = vmatprep.subr.mxu0 %v380
        %1065 = vmatpush1.msra.mxu0 %v379
        %1066 = vmatprep.subr.mxu0 %v374
        %1067 = vmatpush1.msra.mxu0 %v373
        %1068 = vmatprep.subr.mxu0 %v368
        %1069 = vmatpush1.msra.mxu0 %v367
        %1070 = vmatprep.subr.mxu0 %v554
        %1071 = vmatpush2.msra.mxu0 %v553
        %1072 = vmatprep.subr.mxu0 %v548
        %1073 = vmatpush2.msra.mxu0 %v547
        %1074 = vmatprep.subr.mxu0 %v542
        %1075 = vmatpush2.msra.mxu0 %v541
        %1076 = vmatprep.subr.mxu0 %v536
        %1077 = vmatpush2.msra.mxu0 %v535
        %1078 = vmatprep.subr.mxu0 %v530
        %1079 = vmatpush2.msra.mxu0 %v529
        %1080 = vmatprep.subr.mxu0 %v524
        %1081 = vmatpush2.msra.mxu0 %v523
        %1082 = vmatprep.subr.mxu0 %v518
        %1083 = vmatpush2.msra.mxu0 %v517
        %1084 = vmatprep.subr.mxu0 %v512
        %1085 = vmatpush2.msra.mxu0 %v511
        %1086 = vmatprep.subr.mxu0 %v506
        %1087 = vmatpush2.msra.mxu0 %v505
        %1088 = vmatprep.subr.mxu0 %v500
        %1089 = vmatpush2.msra.mxu0 %v499
        %1090 = vmatprep.subr.mxu0 %v494
        %1091 = vmatpush2.msra.mxu0 %v493
        %1092 = vmatprep.subr.mxu0 %v488
        %1093 = vmatpush2.msra.mxu0 %v487
        %1094 = vmatprep.subr.mxu0 %v482
        %1095 = vmatpush2.msra.mxu0 %v481
        %1096 = vmatprep.subr.mxu0 %v476
        %1097 = vmatpush2.msra.mxu0 %v475
        %1098 = vmatprep.subr.mxu0 %v470
        %1099 = vmatpush2.msra.mxu0 %v469
        %1100 = vmatprep.subr.mxu0 %v464
        %1101 = vmatpush2.msra.mxu0 %v463
        %1102 = vmatprep.mubr.f32.mxu0 %v238
        %1103 = vmatmul.mubr.f32.gmra.mxu0 %v237
        %v1104 = vpop.f32.mrf.mxu0
        %v1105 = vadd.f32 %v570, %v1104
        %v1106 = vpop.f32.mrf.mxu0
        %v1107 = vadd.f32 %v574, %v1106
        %1108 = vmatprep.mubr.f32.mxu0 %v240
        %1109 = vmatmul.mubr.f32.gmra.mxu0 %v239
        %v1110 = vpop.f32.mrf.mxu0
        %v1111 = vadd.f32 %v570, %v1110
        %v1112 = vpop.f32.mrf.mxu0
        %v1113 = vadd.f32 %v574, %v1112
        %1114 = vmatprep.mubr.f32.mxu0 %v242
        %1115 = vmatmul.mubr.f32.gmra.mxu0 %v241
        %v1116 = vpop.f32.mrf.mxu0
        %v1117 = vadd.f32 %v570, %v1116
        %v1118 = vpop.f32.mrf.mxu0
        %v1119 = vadd.f32 %v574, %v1118
        %1120 = vmatprep.mubr.f32.mxu0 %v244
        %1121 = vmatmul.mubr.f32.gmra.mxu0 %v243
        %v1122 = vpop.f32.mrf.mxu0
        %v1123 = vadd.f32 %v570, %v1122
        %v1124 = vpop.f32.mrf.mxu0
        %v1125 = vadd.f32 %v574, %v1124
        %1126 = vmatprep.mubr.f32.mxu0 %v246
        %1127 = vmatmul.mubr.f32.gmra.mxu0 %v245
        %v1128 = vpop.f32.mrf.mxu0
        %v1129 = vadd.f32 %v570, %v1128
        %v1130 = vpop.f32.mrf.mxu0
        %v1131 = vadd.f32 %v574, %v1130
        %1132 = vmatprep.mubr.f32.mxu0 %v248
        %1133 = vmatmul.mubr.f32.gmra.mxu0 %v247
        %v1134 = vpop.f32.mrf.mxu0
        %v1135 = vadd.f32 %v570, %v1134
        %v1136 = vpop.f32.mrf.mxu0
        %v1137 = vadd.f32 %v574, %v1136
        %1138 = vmatprep.mubr.f32.mxu0 %v250
        %1139 = vmatmul.mubr.f32.gmra.mxu0 %v249
        %v1140 = vpop.f32.mrf.mxu0
        %v1141 = vadd.f32 %v570, %v1140
        %v1142 = vpop.f32.mrf.mxu0
        %v1143 = vadd.f32 %v574, %v1142
        %1144 = vmatprep.mubr.f32.mxu0 %v252
        %1145 = vmatmul.mubr.f32.gmra.mxu0 %v251
        %v1146 = vpop.f32.mrf.mxu0
        %v1147 = vadd.f32 %v570, %v1146
        %v1148 = vpop.f32.mrf.mxu0
        %v1149 = vadd.f32 %v574, %v1148
        %1150 = vmatprep.mubr.f32.mxu0 %v254
        %1151 = vmatmul.mubr.f32.gmra.mxu0 %v253
        %v1152 = vpop.f32.mrf.mxu0
        %v1153 = vadd.f32 %v570, %v1152
        %v1154 = vpop.f32.mrf.mxu0
        %v1155 = vadd.f32 %v574, %v1154
        %1156 = vmatprep.mubr.f32.mxu0 %v256
        %1157 = vmatmul.mubr.f32.gmra.mxu0 %v255
        %v1158 = vpop.f32.mrf.mxu0
        %v1159 = vadd.f32 %v570, %v1158
        %v1160 = vpop.f32.mrf.mxu0
        %v1161 = vadd.f32 %v574, %v1160
        %1162 = vmatprep.mubr.f32.mxu0 %v258
        %1163 = vmatmul.mubr.f32.gmra.mxu0 %v257
        %v1164 = vpop.f32.mrf.mxu0
        %v1165 = vadd.f32 %v570, %v1164
        %v1166 = vpop.f32.mrf.mxu0
        %v1167 = vadd.f32 %v574, %v1166
        %1168 = vmatprep.mubr.f32.mxu0 %v260
        %1169 = vmatmul.mubr.f32.gmra.mxu0 %v259
        %v1170 = vpop.f32.mrf.mxu0
        %v1171 = vadd.f32 %v570, %v1170
        %v1172 = vpop.f32.mrf.mxu0
        %v1173 = vadd.f32 %v574, %v1172
        %1174 = vmatprep.mubr.f32.mxu0 %v262
        %1175 = vmatmul.mubr.f32.gmra.mxu0 %v261
        %v1176 = vpop.f32.mrf.mxu0
        %v1177 = vadd.f32 %v570, %v1176
        %v1178 = vpop.f32.mrf.mxu0
        %v1179 = vadd.f32 %v574, %v1178
        %1180 = vmatprep.mubr.f32.mxu0 %v264
        %1181 = vmatmul.mubr.f32.gmra.mxu0 %v263
        %v1182 = vpop.f32.mrf.mxu0
        %v1183 = vadd.f32 %v570, %v1182
        %v1184 = vpop.f32.mrf.mxu0
        %v1185 = vadd.f32 %v574, %v1184
        %1186 = vmatprep.mubr.f32.mxu0 %v266
        %1187 = vmatmul.mubr.f32.gmra.mxu0 %v265
        %v1188 = vpop.f32.mrf.mxu0
        %v1189 = vadd.f32 %v570, %v1188
        %v1190 = vpop.f32.mrf.mxu0
        %v1191 = vadd.f32 %v574, %v1190
        %1192 = vmatprep.mubr.f32.mxu0 %v268
        %1193 = vmatmul.mubr.f32.gmra.mxu0 %v267
        %v1194 = vpop.f32.mrf.mxu0
        %v1195 = vadd.f32 %v570, %v1194
        %v1196 = vpop.f32.mrf.mxu0
        %v1197 = vadd.f32 %v574, %v1196
        %1198 = vmatprep.mubr.f32.mxu0 %v270
        %1199 = vmatmul.mubr.f32.gmra.mxu0 %v269
        %v1200 = vpop.f32.mrf.mxu0
        %v1201 = vadd.f32 %v570, %v1200
        %v1202 = vpop.f32.mrf.mxu0
        %v1203 = vadd.f32 %v574, %v1202
        %1204 = vmatprep.mubr.f32.mxu0 %v272
        %1205 = vmatmul.mubr.f32.gmra.mxu0 %v271
        %v1206 = vpop.f32.mrf.mxu0
        %v1207 = vadd.f32 %v570, %v1206
        %v1208 = vpop.f32.mrf.mxu0
        %v1209 = vadd.f32 %v574, %v1208
        %1210 = vmatprep.mubr.f32.mxu0 %v274
        %1211 = vmatmul.mubr.f32.gmra.mxu0 %v273
        %v1212 = vpop.f32.mrf.mxu0
        %v1213 = vadd.f32 %v570, %v1212
        %v1214 = vpop.f32.mrf.mxu0
        %v1215 = vadd.f32 %v574, %v1214
        %1216 = vmatprep.mubr.f32.mxu0 %v276
        %1217 = vmatmul.mubr.f32.gmra.mxu0 %v275
        %v1218 = vpop.f32.mrf.mxu0
        %v1219 = vadd.f32 %v570, %v1218
        %v1220 = vpop.f32.mrf.mxu0
        %v1221 = vadd.f32 %v574, %v1220
        %1222 = vmatprep.mubr.f32.mxu0 %v278
        %1223 = vmatmul.mubr.f32.gmra.mxu0 %v277
        %v1224 = vpop.f32.mrf.mxu0
        %v1225 = vadd.f32 %v570, %v1224
        %v1226 = vpop.f32.mrf.mxu0
        %v1227 = vadd.f32 %v574, %v1226
        %1228 = vmatprep.mubr.f32.mxu0 %v280
        %1229 = vmatmul.mubr.f32.gmra.mxu0 %v279
        %v1230 = vpop.f32.mrf.mxu0
        %v1231 = vadd.f32 %v570, %v1230
        %v1232 = vpop.f32.mrf.mxu0
        %v1233 = vadd.f32 %v574, %v1232
        %1234 = vmatprep.mubr.f32.mxu0 %v282
        %1235 = vmatmul.mubr.f32.gmra.mxu0 %v281
        %v1236 = vpop.f32.mrf.mxu0
        %v1237 = vadd.f32 %v570, %v1236
        %v1238 = vpop.f32.mrf.mxu0
        %v1239 = vadd.f32 %v574, %v1238
        %1240 = vmatprep.mubr.f32.mxu0 %v284
        %1241 = vmatmul.mubr.f32.gmra.mxu0 %v283
        %v1242 = vpop.f32.mrf.mxu0
        %v1243 = vadd.f32 %v570, %v1242
        %v1244 = vpop.f32.mrf.mxu0
        %v1245 = vadd.f32 %v574, %v1244
        %1246 = vmatprep.mubr.f32.mxu0 %v286
        %1247 = vmatmul.mubr.f32.gmra.mxu0 %v285
        %v1248 = vpop.f32.mrf.mxu0
        %v1249 = vadd.f32 %v570, %v1248
        %v1250 = vpop.f32.mrf.mxu0
        %v1251 = vadd.f32 %v574, %v1250
        %1252 = vmatprep.mubr.f32.mxu0 %v288
        %1253 = vmatmul.mubr.f32.gmra.mxu0 %v287
        %v1254 = vpop.f32.mrf.mxu0
        %v1255 = vadd.f32 %v570, %v1254
        %v1256 = vpop.f32.mrf.mxu0
        %v1257 = vadd.f32 %v574, %v1256
        %1258 = vmatprep.mubr.f32.mxu0 %v290
        %1259 = vmatmul.mubr.f32.gmra.mxu0 %v289
        %v1260 = vpop.f32.mrf.mxu0
        %v1261 = vadd.f32 %v570, %v1260
        %v1262 = vpop.f32.mrf.mxu0
        %v1263 = vadd.f32 %v574, %v1262
        %1264 = vmatprep.mubr.f32.mxu0 %v292
        %1265 = vmatmul.mubr.f32.gmra.mxu0 %v291
        %v1266 = vpop.f32.mrf.mxu0
        %v1267 = vadd.f32 %v570, %v1266
        %v1268 = vpop.f32.mrf.mxu0
        %v1269 = vadd.f32 %v574, %v1268
        %1270 = vmatprep.mubr.f32.mxu0 %v294
        %1271 = vmatmul.mubr.f32.gmra.mxu0 %v293
        %v1272 = vpop.f32.mrf.mxu0
        %v1273 = vadd.f32 %v570, %v1272
        %v1274 = vpop.f32.mrf.mxu0
        %v1275 = vadd.f32 %v574, %v1274
        %1276 = vmatprep.mubr.f32.mxu0 %v296
        %1277 = vmatmul.mubr.f32.gmra.mxu0 %v295
        %v1278 = vpop.f32.mrf.mxu0
        %v1279 = vadd.f32 %v570, %v1278
        %v1280 = vpop.f32.mrf.mxu0
        %v1281 = vadd.f32 %v574, %v1280
        %1282 = vmatprep.mubr.f32.mxu0 %v298
        %1283 = vmatmul.mubr.f32.gmra.mxu0 %v297
        %v1284 = vpop.f32.mrf.mxu0
        %v1285 = vadd.f32 %v570, %v1284
        %v1286 = vpop.f32.mrf.mxu0
        %v1287 = vadd.f32 %v574, %v1286
        %1288 = vmatprep.mubr.f32.mxu0 %v300
        %1289 = vmatmul.mubr.f32.gmra.mxu0 %v299
        %v1290 = vpop.f32.mrf.mxu0
        %v1291 = vadd.f32 %v570, %v1290
        %v1292 = vpop.f32.mrf.mxu0
        %v1293 = vadd.f32 %v574, %v1292
        %1294 = vmatprep.mubr.f32.mxu0 %v302
        %1295 = vmatmul.mubr.f32.gmra.mxu0 %v301
        %v1296 = vpop.f32.mrf.mxu0
        %v1297 = vadd.f32 %v570, %v1296
        %v1298 = vpop.f32.mrf.mxu0
        %v1299 = vadd.f32 %v574, %v1298
        %1300 = vmatprep.mubr.f32.mxu0 %v304
        %1301 = vmatmul.mubr.f32.gmra.mxu0 %v303
        %v1302 = vpop.f32.mrf.mxu0
        %v1303 = vadd.f32 %v570, %v1302
        %v1304 = vpop.f32.mrf.mxu0
        %v1305 = vadd.f32 %v574, %v1304
        %1306 = vmatprep.mubr.f32.mxu0 %v306
        %1307 = vmatmul.mubr.f32.gmra.mxu0 %v305
        %v1308 = vpop.f32.mrf.mxu0
        %v1309 = vadd.f32 %v570, %v1308
        %v1310 = vpop.f32.mrf.mxu0
        %v1311 = vadd.f32 %v574, %v1310
        %1312 = vmatprep.mubr.f32.mxu0 %v308
        %1313 = vmatmul.mubr.f32.gmra.mxu0 %v307
        %v1314 = vpop.f32.mrf.mxu0
        %v1315 = vadd.f32 %v570, %v1314
        %v1316 = vpop.f32.mrf.mxu0
        %v1317 = vadd.f32 %v574, %v1316
        %1318 = vmatprep.mubr.f32.mxu0 %v310
        %1319 = vmatmul.mubr.f32.gmra.mxu0 %v309
        %v1320 = vpop.f32.mrf.mxu0
        %v1321 = vadd.f32 %v570, %v1320
        %v1322 = vpop.f32.mrf.mxu0
        %v1323 = vadd.f32 %v574, %v1322
        %1324 = vmatprep.mubr.f32.mxu0 %v312
        %1325 = vmatmul.mubr.f32.gmra.mxu0 %v311
        %v1326 = vpop.f32.mrf.mxu0
        %v1327 = vadd.f32 %v570, %v1326
        %v1328 = vpop.f32.mrf.mxu0
        %v1329 = vadd.f32 %v574, %v1328
        %1330 = vmatprep.mubr.f32.mxu0 %v314
        %1331 = vmatmul.mubr.f32.gmra.mxu0 %v313
        %v1332 = vpop.f32.mrf.mxu0
        %v1333 = vadd.f32 %v570, %v1332
        %v1334 = vpop.f32.mrf.mxu0
        %v1335 = vadd.f32 %v574, %v1334
        %1336 = vmatprep.mubr.f32.mxu0 %v316
        %1337 = vmatmul.mubr.f32.gmra.mxu0 %v315
        %v1338 = vpop.f32.mrf.mxu0
        %v1339 = vadd.f32 %v570, %v1338
        %v1340 = vpop.f32.mrf.mxu0
        %v1341 = vadd.f32 %v574, %v1340
        %1342 = vmatprep.mubr.f32.mxu0 %v318
        %1343 = vmatmul.mubr.f32.gmra.mxu0 %v317
        %v1344 = vpop.f32.mrf.mxu0
        %v1345 = vadd.f32 %v570, %v1344
        %v1346 = vpop.f32.mrf.mxu0
        %v1347 = vadd.f32 %v574, %v1346
        %1348 = vmatprep.mubr.f32.mxu0 %v320
        %1349 = vmatmul.mubr.f32.gmra.mxu0 %v319
        %v1350 = vpop.f32.mrf.mxu0
        %v1351 = vadd.f32 %v570, %v1350
        %v1352 = vpop.f32.mrf.mxu0
        %v1353 = vadd.f32 %v574, %v1352
        %1354 = vmatprep.mubr.f32.mxu0 %v322
        %1355 = vmatmul.mubr.f32.gmra.mxu0 %v321
        %v1356 = vpop.f32.mrf.mxu0
        %v1357 = vadd.f32 %v570, %v1356
        %v1358 = vpop.f32.mrf.mxu0
        %v1359 = vadd.f32 %v574, %v1358
        %1360 = vmatprep.mubr.f32.mxu0 %v324
        %1361 = vmatmul.mubr.f32.gmra.mxu0 %v323
        %v1362 = vpop.f32.mrf.mxu0
        %v1363 = vadd.f32 %v570, %v1362
        %v1364 = vpop.f32.mrf.mxu0
        %v1365 = vadd.f32 %v574, %v1364
        %1366 = vmatprep.mubr.f32.mxu0 %v326
        %1367 = vmatmul.mubr.f32.gmra.mxu0 %v325
        %v1368 = vpop.f32.mrf.mxu0
        %v1369 = vadd.f32 %v570, %v1368
        %v1370 = vpop.f32.mrf.mxu0
        %v1371 = vadd.f32 %v574, %v1370
        %1372 = vmatprep.mubr.f32.mxu0 %v328
        %1373 = vmatmul.mubr.f32.gmra.mxu0 %v327
        %v1374 = vpop.f32.mrf.mxu0
        %v1375 = vadd.f32 %v570, %v1374
        %v1376 = vpop.f32.mrf.mxu0
        %v1377 = vadd.f32 %v574, %v1376
        %1378 = vmatprep.mubr.f32.mxu0 %v330
        %1379 = vmatmul.mubr.f32.gmra.mxu0 %v329
        %v1380 = vpop.f32.mrf.mxu0
        %v1381 = vadd.f32 %v570, %v1380
        %v1382 = vpop.f32.mrf.mxu0
        %v1383 = vadd.f32 %v574, %v1382
        %1384 = vmatprep.mubr.f32.mxu0 %v332
        %1385 = vmatmul.mubr.f32.gmra.mxu0 %v331
        %v1386 = vpop.f32.mrf.mxu0
        %v1387 = vadd.f32 %v570, %v1386
        %v1388 = vpop.f32.mrf.mxu0
        %v1389 = vadd.f32 %v574, %v1388
        %1390 = vmatprep.mubr.f32.mxu0 %v334
        %1391 = vmatmul.mubr.f32.gmra.mxu0 %v333
        %v1392 = vpop.f32.mrf.mxu0
        %v1393 = vadd.f32 %v570, %v1392
        %v1394 = vpop.f32.mrf.mxu0
        %v1395 = vadd.f32 %v574, %v1394
        %1396 = vmatprep.mubr.f32.mxu0 %v336
        %1397 = vmatmul.mubr.f32.gmra.mxu0 %v335
        %v1398 = vpop.f32.mrf.mxu0
        %v1399 = vadd.f32 %v570, %v1398
        %v1400 = vpop.f32.mrf.mxu0
        %v1401 = vadd.f32 %v574, %v1400
        %1402 = vmatprep.mubr.f32.mxu0 %v338
        %1403 = vmatmul.mubr.f32.gmra.mxu0 %v337
        %v1404 = vpop.f32.mrf.mxu0
        %v1405 = vadd.f32 %v570, %v1404
        %v1406 = vpop.f32.mrf.mxu0
        %v1407 = vadd.f32 %v574, %v1406
        %1408 = vmatprep.mubr.f32.mxu0 %v340
        %1409 = vmatmul.mubr.f32.gmra.mxu0 %v339
        %v1410 = vpop.f32.mrf.mxu0
        %v1411 = vadd.f32 %v570, %v1410
        %v1412 = vpop.f32.mrf.mxu0
        %v1413 = vadd.f32 %v574, %v1412
        %1414 = vmatprep.mubr.f32.mxu0 %v342
        %1415 = vmatmul.mubr.f32.gmra.mxu0 %v341
        %v1416 = vpop.f32.mrf.mxu0
        %v1417 = vadd.f32 %v570, %v1416
        %v1418 = vpop.f32.mrf.mxu0
        %v1419 = vadd.f32 %v574, %v1418
        %1420 = vmatprep.mubr.f32.mxu0 %v344
        %1421 = vmatmul.mubr.f32.gmra.mxu0 %v343
        %v1422 = vpop.f32.mrf.mxu0
        %v1423 = vadd.f32 %v570, %v1422
        %v1424 = vpop.f32.mrf.mxu0
        %v1425 = vadd.f32 %v574, %v1424
        %1426 = vmatprep.mubr.f32.mxu0 %v346
        %1427 = vmatmul.mubr.f32.gmra.mxu0 %v345
        %v1428 = vpop.f32.mrf.mxu0
        %v1429 = vadd.f32 %v570, %v1428
        %v1430 = vpop.f32.mrf.mxu0
        %v1431 = vadd.f32 %v574, %v1430
        %1432 = vmatprep.mubr.f32.mxu0 %v348
        %1433 = vmatmul.mubr.f32.gmra.mxu0 %v347
        %v1434 = vpop.f32.mrf.mxu0
        %v1435 = vadd.f32 %v570, %v1434
        %v1436 = vpop.f32.mrf.mxu0
        %v1437 = vadd.f32 %v574, %v1436
        %1438 = vmatprep.mubr.f32.mxu0 %v350
        %1439 = vmatmul.mubr.f32.gmra.mxu0 %v349
        %v1440 = vpop.f32.mrf.mxu0
        %v1441 = vadd.f32 %v570, %v1440
        %v1442 = vpop.f32.mrf.mxu0
        %v1443 = vadd.f32 %v574, %v1442
        %1444 = vmatprep.mubr.f32.mxu0 %v352
        %1445 = vmatmul.mubr.f32.gmra.mxu0 %v351
        %v1446 = vpop.f32.mrf.mxu0
        %v1447 = vadd.f32 %v570, %v1446
        %v1448 = vpop.f32.mrf.mxu0
        %v1449 = vadd.f32 %v574, %v1448
        %1450 = vmatprep.mubr.f32.mxu0 %v354
        %1451 = vmatmul.mubr.f32.gmra.mxu0 %v353
        %v1452 = vpop.f32.mrf.mxu0
        %v1453 = vadd.f32 %v570, %v1452
        %v1454 = vpop.f32.mrf.mxu0
        %v1455 = vadd.f32 %v574, %v1454
        %1456 = vmatprep.mubr.f32.mxu0 %v356
        %1457 = vmatmul.mubr.f32.gmra.mxu0 %v355
        %v1458 = vpop.f32.mrf.mxu0
        %v1459 = vadd.f32 %v570, %v1458
        %v1460 = vpop.f32.mrf.mxu0
        %v1461 = vadd.f32 %v574, %v1460
        %1462 = vmatprep.mubr.f32.mxu0 %v358
        %1463 = vmatmul.mubr.f32.gmra.mxu0 %v357
        %v1464 = vpop.f32.mrf.mxu0
        %v1465 = vadd.f32 %v570, %v1464
        %v1466 = vpop.f32.mrf.mxu0
        %v1467 = vadd.f32 %v574, %v1466
        %1468 = vmatprep.mubr.f32.mxu0 %v360
        %1469 = vmatmul.mubr.f32.gmra.mxu0 %v359
        %v1470 = vpop.f32.mrf.mxu0
        %v1471 = vadd.f32 %v570, %v1470
        %v1472 = vpop.f32.mrf.mxu0
        %v1473 = vadd.f32 %v574, %v1472
        %1474 = vmatprep.mubr.f32.mxu0 %v362
        %1475 = vmatmul.mubr.f32.gmra.mxu0 %v361
        %v1476 = vpop.f32.mrf.mxu0
        %v1477 = vadd.f32 %v570, %v1476
        %v1478 = vpop.f32.mrf.mxu0
        %v1479 = vadd.f32 %v574, %v1478
        %1480 = vmatprep.mubr.f32.mxu0 %v364
        %1481 = vmatmul.mubr.f32.gmra.mxu0 %v363
        %v1482 = vpop.f32.mrf.mxu0
        %v1483 = vadd.f32 %v570, %v1482
        %v1484 = vpop.f32.mrf.mxu0
        %v1485 = vadd.f32 %v574, %v1484
        %1486 = vdwg.mxu0
        %1487 = vmatprep.subr.mxu0 %v460
        %1488 = vmatpush1.msra.mxu0 %v459
        %1489 = vmatprep.subr.mxu0 %v454
        %1490 = vmatpush1.msra.mxu0 %v453
        %1491 = vmatprep.subr.mxu0 %v448
        %1492 = vmatpush1.msra.mxu0 %v447
        %1493 = vmatprep.subr.mxu0 %v442
        %1494 = vmatpush1.msra.mxu0 %v441
        %1495 = vmatprep.subr.mxu0 %v436
        %1496 = vmatpush1.msra.mxu0 %v435
        %1497 = vmatprep.subr.mxu0 %v430
        %1498 = vmatpush1.msra.mxu0 %v429
        %1499 = vmatprep.subr.mxu0 %v424
        %1500 = vmatpush1.msra.mxu0 %v423
        %1501 = vmatprep.subr.mxu0 %v418
        %1502 = vmatpush1.msra.mxu0 %v417
        %1503 = vmatprep.subr.mxu0 %v412
        %1504 = vmatpush1.msra.mxu0 %v411
        %1505 = vmatprep.subr.mxu0 %v406
        %1506 = vmatpush1.msra.mxu0 %v405
        %1507 = vmatprep.subr.mxu0 %v400
        %1508 = vmatpush1.msra.mxu0 %v399
        %1509 = vmatprep.subr.mxu0 %v394
        %1510 = vmatpush1.msra.mxu0 %v393
        %1511 = vmatprep.subr.mxu0 %v388
        %1512 = vmatpush1.msra.mxu0 %v387
        %1513 = vmatprep.subr.mxu0 %v382
        %1514 = vmatpush1.msra.mxu0 %v381
        %1515 = vmatprep.subr.mxu0 %v376
        %1516 = vmatpush1.msra.mxu0 %v375
        %1517 = vmatprep.subr.mxu0 %v370
        %1518 = vmatpush1.msra.mxu0 %v369
        %1519 = vmatprep.subr.mxu0 %v556
        %1520 = vmatpush2.msra.mxu0 %v555
        %1521 = vmatprep.subr.mxu0 %v550
        %1522 = vmatpush2.msra.mxu0 %v549
        %1523 = vmatprep.subr.mxu0 %v544
        %1524 = vmatpush2.msra.mxu0 %v543
        %1525 = vmatprep.subr.mxu0 %v538
        %1526 = vmatpush2.msra.mxu0 %v537
        %1527 = vmatprep.subr.mxu0 %v532
        %1528 = vmatpush2.msra.mxu0 %v531
        %1529 = vmatprep.subr.mxu0 %v526
        %1530 = vmatpush2.msra.mxu0 %v525
        %1531 = vmatprep.subr.mxu0 %v520
        %1532 = vmatpush2.msra.mxu0 %v519
        %1533 = vmatprep.subr.mxu0 %v514
        %1534 = vmatpush2.msra.mxu0 %v513
        %1535 = vmatprep.subr.mxu0 %v508
        %1536 = vmatpush2.msra.mxu0 %v507
        %1537 = vmatprep.subr.mxu0 %v502
        %1538 = vmatpush2.msra.mxu0 %v501
        %1539 = vmatprep.subr.mxu0 %v496
        %1540 = vmatpush2.msra.mxu0 %v495
        %1541 = vmatprep.subr.mxu0 %v490
        %1542 = vmatpush2.msra.mxu0 %v489
        %1543 = vmatprep.subr.mxu0 %v484
        %1544 = vmatpush2.msra.mxu0 %v483
        %1545 = vmatprep.subr.mxu0 %v478
        %1546 = vmatpush2.msra.mxu0 %v477
        %1547 = vmatprep.subr.mxu0 %v472
        %1548 = vmatpush2.msra.mxu0 %v471
        %1549 = vmatprep.subr.mxu0 %v466
        %1550 = vmatpush2.msra.mxu0 %v465
        %1551 = vmatprep.mubr.f32.mxu0 %v238
        %1552 = vmatmul.mubr.f32.gmra.mxu0 %v237
        %v1553 = vpop.f32.mrf.mxu0
        %v1554 = vadd.f32 %v578, %v1553
        %v1555 = vpop.f32.mrf.mxu0
        %v1556 = vadd.f32 %v582, %v1555
        %1557 = vmatprep.mubr.f32.mxu0 %v240
        %1558 = vmatmul.mubr.f32.gmra.mxu0 %v239
        %v1559 = vpop.f32.mrf.mxu0
        %v1560 = vadd.f32 %v578, %v1559
        %v1561 = vpop.f32.mrf.mxu0
        %v1562 = vadd.f32 %v582, %v1561
        %1563 = vmatprep.mubr.f32.mxu0 %v242
        %1564 = vmatmul.mubr.f32.gmra.mxu0 %v241
        %v1565 = vpop.f32.mrf.mxu0
        %v1566 = vadd.f32 %v578, %v1565
        %v1567 = vpop.f32.mrf.mxu0
        %v1568 = vadd.f32 %v582, %v1567
        %1569 = vmatprep.mubr.f32.mxu0 %v244
        %1570 = vmatmul.mubr.f32.gmra.mxu0 %v243
        %v1571 = vpop.f32.mrf.mxu0
        %v1572 = vadd.f32 %v578, %v1571
        %v1573 = vpop.f32.mrf.mxu0
        %v1574 = vadd.f32 %v582, %v1573
        %1575 = vmatprep.mubr.f32.mxu0 %v246
        %1576 = vmatmul.mubr.f32.gmra.mxu0 %v245
        %v1577 = vpop.f32.mrf.mxu0
        %v1578 = vadd.f32 %v578, %v1577
        %v1579 = vpop.f32.mrf.mxu0
        %v1580 = vadd.f32 %v582, %v1579
        %1581 = vmatprep.mubr.f32.mxu0 %v248
        %1582 = vmatmul.mubr.f32.gmra.mxu0 %v247
        %v1583 = vpop.f32.mrf.mxu0
        %v1584 = vadd.f32 %v578, %v1583
        %v1585 = vpop.f32.mrf.mxu0
        %v1586 = vadd.f32 %v582, %v1585
        %1587 = vmatprep.mubr.f32.mxu0 %v250
        %1588 = vmatmul.mubr.f32.gmra.mxu0 %v249
        %v1589 = vpop.f32.mrf.mxu0
        %v1590 = vadd.f32 %v578, %v1589
        %v1591 = vpop.f32.mrf.mxu0
        %v1592 = vadd.f32 %v582, %v1591
        %1593 = vmatprep.mubr.f32.mxu0 %v252
        %1594 = vmatmul.mubr.f32.gmra.mxu0 %v251
        %v1595 = vpop.f32.mrf.mxu0
        %v1596 = vadd.f32 %v578, %v1595
        %v1597 = vpop.f32.mrf.mxu0
        %v1598 = vadd.f32 %v582, %v1597
        %1599 = vmatprep.mubr.f32.mxu0 %v254
        %1600 = vmatmul.mubr.f32.gmra.mxu0 %v253
        %v1601 = vpop.f32.mrf.mxu0
        %v1602 = vadd.f32 %v578, %v1601
        %v1603 = vpop.f32.mrf.mxu0
        %v1604 = vadd.f32 %v582, %v1603
        %1605 = vmatprep.mubr.f32.mxu0 %v256
        %1606 = vmatmul.mubr.f32.gmra.mxu0 %v255
        %v1607 = vpop.f32.mrf.mxu0
        %v1608 = vadd.f32 %v578, %v1607
        %v1609 = vpop.f32.mrf.mxu0
        %v1610 = vadd.f32 %v582, %v1609
        %1611 = vmatprep.mubr.f32.mxu0 %v258
        %1612 = vmatmul.mubr.f32.gmra.mxu0 %v257
        %v1613 = vpop.f32.mrf.mxu0
        %v1614 = vadd.f32 %v578, %v1613
        %v1615 = vpop.f32.mrf.mxu0
        %v1616 = vadd.f32 %v582, %v1615
        %1617 = vmatprep.mubr.f32.mxu0 %v260
        %1618 = vmatmul.mubr.f32.gmra.mxu0 %v259
        %v1619 = vpop.f32.mrf.mxu0
        %v1620 = vadd.f32 %v578, %v1619
        %v1621 = vpop.f32.mrf.mxu0
        %v1622 = vadd.f32 %v582, %v1621
        %1623 = vmatprep.mubr.f32.mxu0 %v262
        %1624 = vmatmul.mubr.f32.gmra.mxu0 %v261
        %v1625 = vpop.f32.mrf.mxu0
        %v1626 = vadd.f32 %v578, %v1625
        %v1627 = vpop.f32.mrf.mxu0
        %v1628 = vadd.f32 %v582, %v1627
        %1629 = vmatprep.mubr.f32.mxu0 %v264
        %1630 = vmatmul.mubr.f32.gmra.mxu0 %v263
        %v1631 = vpop.f32.mrf.mxu0
        %v1632 = vadd.f32 %v578, %v1631
        %v1633 = vpop.f32.mrf.mxu0
        %v1634 = vadd.f32 %v582, %v1633
        %1635 = vmatprep.mubr.f32.mxu0 %v266
        %1636 = vmatmul.mubr.f32.gmra.mxu0 %v265
        %v1637 = vpop.f32.mrf.mxu0
        %v1638 = vadd.f32 %v578, %v1637
        %v1639 = vpop.f32.mrf.mxu0
        %v1640 = vadd.f32 %v582, %v1639
        %1641 = vmatprep.mubr.f32.mxu0 %v268
        %1642 = vmatmul.mubr.f32.gmra.mxu0 %v267
        %v1643 = vpop.f32.mrf.mxu0
        %v1644 = vadd.f32 %v578, %v1643
        %v1645 = vpop.f32.mrf.mxu0
        %v1646 = vadd.f32 %v582, %v1645
        %1647 = vmatprep.mubr.f32.mxu0 %v270
        %1648 = vmatmul.mubr.f32.gmra.mxu0 %v269
        %v1649 = vpop.f32.mrf.mxu0
        %v1650 = vadd.f32 %v578, %v1649
        %v1651 = vpop.f32.mrf.mxu0
        %v1652 = vadd.f32 %v582, %v1651
        %1653 = vmatprep.mubr.f32.mxu0 %v272
        %1654 = vmatmul.mubr.f32.gmra.mxu0 %v271
        %v1655 = vpop.f32.mrf.mxu0
        %v1656 = vadd.f32 %v578, %v1655
        %v1657 = vpop.f32.mrf.mxu0
        %v1658 = vadd.f32 %v582, %v1657
        %1659 = vmatprep.mubr.f32.mxu0 %v274
        %1660 = vmatmul.mubr.f32.gmra.mxu0 %v273
        %v1661 = vpop.f32.mrf.mxu0
        %v1662 = vadd.f32 %v578, %v1661
        %v1663 = vpop.f32.mrf.mxu0
        %v1664 = vadd.f32 %v582, %v1663
        %1665 = vmatprep.mubr.f32.mxu0 %v276
        %1666 = vmatmul.mubr.f32.gmra.mxu0 %v275
        %v1667 = vpop.f32.mrf.mxu0
        %v1668 = vadd.f32 %v578, %v1667
        %v1669 = vpop.f32.mrf.mxu0
        %v1670 = vadd.f32 %v582, %v1669
        %1671 = vmatprep.mubr.f32.mxu0 %v278
        %1672 = vmatmul.mubr.f32.gmra.mxu0 %v277
        %v1673 = vpop.f32.mrf.mxu0
        %v1674 = vadd.f32 %v578, %v1673
        %v1675 = vpop.f32.mrf.mxu0
        %v1676 = vadd.f32 %v582, %v1675
        %1677 = vmatprep.mubr.f32.mxu0 %v280
        %1678 = vmatmul.mubr.f32.gmra.mxu0 %v279
        %v1679 = vpop.f32.mrf.mxu0
        %v1680 = vadd.f32 %v578, %v1679
        %v1681 = vpop.f32.mrf.mxu0
        %v1682 = vadd.f32 %v582, %v1681
        %1683 = vmatprep.mubr.f32.mxu0 %v282
        %1684 = vmatmul.mubr.f32.gmra.mxu0 %v281
        %v1685 = vpop.f32.mrf.mxu0
        %v1686 = vadd.f32 %v578, %v1685
        %v1687 = vpop.f32.mrf.mxu0
        %v1688 = vadd.f32 %v582, %v1687
        %1689 = vmatprep.mubr.f32.mxu0 %v284
        %1690 = vmatmul.mubr.f32.gmra.mxu0 %v283
        %v1691 = vpop.f32.mrf.mxu0
        %v1692 = vadd.f32 %v578, %v1691
        %v1693 = vpop.f32.mrf.mxu0
        %v1694 = vadd.f32 %v582, %v1693
        %1695 = vmatprep.mubr.f32.mxu0 %v286
        %1696 = vmatmul.mubr.f32.gmra.mxu0 %v285
        %v1697 = vpop.f32.mrf.mxu0
        %v1698 = vadd.f32 %v578, %v1697
        %v1699 = vpop.f32.mrf.mxu0
        %v1700 = vadd.f32 %v582, %v1699
        %1701 = vmatprep.mubr.f32.mxu0 %v288
        %1702 = vmatmul.mubr.f32.gmra.mxu0 %v287
        %v1703 = vpop.f32.mrf.mxu0
        %v1704 = vadd.f32 %v578, %v1703
        %v1705 = vpop.f32.mrf.mxu0
        %v1706 = vadd.f32 %v582, %v1705
        %1707 = vmatprep.mubr.f32.mxu0 %v290
        %1708 = vmatmul.mubr.f32.gmra.mxu0 %v289
        %v1709 = vpop.f32.mrf.mxu0
        %v1710 = vadd.f32 %v578, %v1709
        %v1711 = vpop.f32.mrf.mxu0
        %v1712 = vadd.f32 %v582, %v1711
        %1713 = vmatprep.mubr.f32.mxu0 %v292
        %1714 = vmatmul.mubr.f32.gmra.mxu0 %v291
        %v1715 = vpop.f32.mrf.mxu0
        %v1716 = vadd.f32 %v578, %v1715
        %v1717 = vpop.f32.mrf.mxu0
        %v1718 = vadd.f32 %v582, %v1717
        %1719 = vmatprep.mubr.f32.mxu0 %v294
        %1720 = vmatmul.mubr.f32.gmra.mxu0 %v293
        %v1721 = vpop.f32.mrf.mxu0
        %v1722 = vadd.f32 %v578, %v1721
        %v1723 = vpop.f32.mrf.mxu0
        %v1724 = vadd.f32 %v582, %v1723
        %1725 = vmatprep.mubr.f32.mxu0 %v296
        %1726 = vmatmul.mubr.f32.gmra.mxu0 %v295
        %v1727 = vpop.f32.mrf.mxu0
        %v1728 = vadd.f32 %v578, %v1727
        %v1729 = vpop.f32.mrf.mxu0
        %v1730 = vadd.f32 %v582, %v1729
        %1731 = vmatprep.mubr.f32.mxu0 %v298
        %1732 = vmatmul.mubr.f32.gmra.mxu0 %v297
        %v1733 = vpop.f32.mrf.mxu0
        %v1734 = vadd.f32 %v578, %v1733
        %v1735 = vpop.f32.mrf.mxu0
        %v1736 = vadd.f32 %v582, %v1735
        %1737 = vmatprep.mubr.f32.mxu0 %v300
        %1738 = vmatmul.mubr.f32.gmra.mxu0 %v299
        %v1739 = vpop.f32.mrf.mxu0
        %v1740 = vadd.f32 %v578, %v1739
        %v1741 = vpop.f32.mrf.mxu0
        %v1742 = vadd.f32 %v582, %v1741
        %1743 = vmatprep.mubr.f32.mxu0 %v302
        %1744 = vmatmul.mubr.f32.gmra.mxu0 %v301
        %v1745 = vpop.f32.mrf.mxu0
        %v1746 = vadd.f32 %v578, %v1745
        %v1747 = vpop.f32.mrf.mxu0
        %v1748 = vadd.f32 %v582, %v1747
        %1749 = vmatprep.mubr.f32.mxu0 %v304
        %1750 = vmatmul.mubr.f32.gmra.mxu0 %v303
        %v1751 = vpop.f32.mrf.mxu0
        %v1752 = vadd.f32 %v578, %v1751
        %v1753 = vpop.f32.mrf.mxu0
        %v1754 = vadd.f32 %v582, %v1753
        %1755 = vmatprep.mubr.f32.mxu0 %v306
        %1756 = vmatmul.mubr.f32.gmra.mxu0 %v305
        %v1757 = vpop.f32.mrf.mxu0
        %v1758 = vadd.f32 %v578, %v1757
        %v1759 = vpop.f32.mrf.mxu0
        %v1760 = vadd.f32 %v582, %v1759
        %1761 = vmatprep.mubr.f32.mxu0 %v308
        %1762 = vmatmul.mubr.f32.gmra.mxu0 %v307
        %v1763 = vpop.f32.mrf.mxu0
        %v1764 = vadd.f32 %v578, %v1763
        %v1765 = vpop.f32.mrf.mxu0
        %v1766 = vadd.f32 %v582, %v1765
        %1767 = vmatprep.mubr.f32.mxu0 %v310
        %1768 = vmatmul.mubr.f32.gmra.mxu0 %v309
        %v1769 = vpop.f32.mrf.mxu0
        %v1770 = vadd.f32 %v578, %v1769
        %v1771 = vpop.f32.mrf.mxu0
        %v1772 = vadd.f32 %v582, %v1771
        %1773 = vmatprep.mubr.f32.mxu0 %v312
        %1774 = vmatmul.mubr.f32.gmra.mxu0 %v311
        %v1775 = vpop.f32.mrf.mxu0
        %v1776 = vadd.f32 %v578, %v1775
        %v1777 = vpop.f32.mrf.mxu0
        %v1778 = vadd.f32 %v582, %v1777
        %1779 = vmatprep.mubr.f32.mxu0 %v314
        %1780 = vmatmul.mubr.f32.gmra.mxu0 %v313
        %v1781 = vpop.f32.mrf.mxu0
        %v1782 = vadd.f32 %v578, %v1781
        %v1783 = vpop.f32.mrf.mxu0
        %v1784 = vadd.f32 %v582, %v1783
        %1785 = vmatprep.mubr.f32.mxu0 %v316
        %1786 = vmatmul.mubr.f32.gmra.mxu0 %v315
        %v1787 = vpop.f32.mrf.mxu0
        %v1788 = vadd.f32 %v578, %v1787
        %v1789 = vpop.f32.mrf.mxu0
        %v1790 = vadd.f32 %v582, %v1789
        %1791 = vmatprep.mubr.f32.mxu0 %v318
        %1792 = vmatmul.mubr.f32.gmra.mxu0 %v317
        %v1793 = vpop.f32.mrf.mxu0
        %v1794 = vadd.f32 %v578, %v1793
        %v1795 = vpop.f32.mrf.mxu0
        %v1796 = vadd.f32 %v582, %v1795
        %1797 = vmatprep.mubr.f32.mxu0 %v320
        %1798 = vmatmul.mubr.f32.gmra.mxu0 %v319
        %v1799 = vpop.f32.mrf.mxu0
        %v1800 = vadd.f32 %v578, %v1799
        %v1801 = vpop.f32.mrf.mxu0
        %v1802 = vadd.f32 %v582, %v1801
        %1803 = vmatprep.mubr.f32.mxu0 %v322
        %1804 = vmatmul.mubr.f32.gmra.mxu0 %v321
        %v1805 = vpop.f32.mrf.mxu0
        %v1806 = vadd.f32 %v578, %v1805
        %v1807 = vpop.f32.mrf.mxu0
        %v1808 = vadd.f32 %v582, %v1807
        %1809 = vmatprep.mubr.f32.mxu0 %v324
        %1810 = vmatmul.mubr.f32.gmra.mxu0 %v323
        %v1811 = vpop.f32.mrf.mxu0
        %v1812 = vadd.f32 %v578, %v1811
        %v1813 = vpop.f32.mrf.mxu0
        %v1814 = vadd.f32 %v582, %v1813
        %1815 = vmatprep.mubr.f32.mxu0 %v326
        %1816 = vmatmul.mubr.f32.gmra.mxu0 %v325
        %v1817 = vpop.f32.mrf.mxu0
        %v1818 = vadd.f32 %v578, %v1817
        %v1819 = vpop.f32.mrf.mxu0
        %v1820 = vadd.f32 %v582, %v1819
        %1821 = vmatprep.mubr.f32.mxu0 %v328
        %1822 = vmatmul.mubr.f32.gmra.mxu0 %v327
        %v1823 = vpop.f32.mrf.mxu0
        %v1824 = vadd.f32 %v578, %v1823
        %v1825 = vpop.f32.mrf.mxu0
        %v1826 = vadd.f32 %v582, %v1825
        %1827 = vmatprep.mubr.f32.mxu0 %v330
        %1828 = vmatmul.mubr.f32.gmra.mxu0 %v329
        %v1829 = vpop.f32.mrf.mxu0
        %v1830 = vadd.f32 %v578, %v1829
        %v1831 = vpop.f32.mrf.mxu0
        %v1832 = vadd.f32 %v582, %v1831
        %1833 = vmatprep.mubr.f32.mxu0 %v332
        %1834 = vmatmul.mubr.f32.gmra.mxu0 %v331
        %v1835 = vpop.f32.mrf.mxu0
        %v1836 = vadd.f32 %v578, %v1835
        %v1837 = vpop.f32.mrf.mxu0
        %v1838 = vadd.f32 %v582, %v1837
        %1839 = vmatprep.mubr.f32.mxu0 %v334
        %1840 = vmatmul.mubr.f32.gmra.mxu0 %v333
        %v1841 = vpop.f32.mrf.mxu0
        %v1842 = vadd.f32 %v578, %v1841
        %v1843 = vpop.f32.mrf.mxu0
        %v1844 = vadd.f32 %v582, %v1843
        %1845 = vmatprep.mubr.f32.mxu0 %v336
        %1846 = vmatmul.mubr.f32.gmra.mxu0 %v335
        %v1847 = vpop.f32.mrf.mxu0
        %v1848 = vadd.f32 %v578, %v1847
        %v1849 = vpop.f32.mrf.mxu0
        %v1850 = vadd.f32 %v582, %v1849
        %1851 = vmatprep.mubr.f32.mxu0 %v338
        %1852 = vmatmul.mubr.f32.gmra.mxu0 %v337
        %v1853 = vpop.f32.mrf.mxu0
        %v1854 = vadd.f32 %v578, %v1853
        %v1855 = vpop.f32.mrf.mxu0
        %v1856 = vadd.f32 %v582, %v1855
        %1857 = vmatprep.mubr.f32.mxu0 %v340
        %1858 = vmatmul.mubr.f32.gmra.mxu0 %v339
        %v1859 = vpop.f32.mrf.mxu0
        %v1860 = vadd.f32 %v578, %v1859
        %v1861 = vpop.f32.mrf.mxu0
        %v1862 = vadd.f32 %v582, %v1861
        %1863 = vmatprep.mubr.f32.mxu0 %v342
        %1864 = vmatmul.mubr.f32.gmra.mxu0 %v341
        %v1865 = vpop.f32.mrf.mxu0
        %v1866 = vadd.f32 %v578, %v1865
        %v1867 = vpop.f32.mrf.mxu0
        %v1868 = vadd.f32 %v582, %v1867
        %1869 = vmatprep.mubr.f32.mxu0 %v344
        %1870 = vmatmul.mubr.f32.gmra.mxu0 %v343
        %v1871 = vpop.f32.mrf.mxu0
        %v1872 = vadd.f32 %v578, %v1871
        %v1873 = vpop.f32.mrf.mxu0
        %v1874 = vadd.f32 %v582, %v1873
        %1875 = vmatprep.mubr.f32.mxu0 %v346
        %1876 = vmatmul.mubr.f32.gmra.mxu0 %v345
        %v1877 = vpop.f32.mrf.mxu0
        %v1878 = vadd.f32 %v578, %v1877
        %v1879 = vpop.f32.mrf.mxu0
        %v1880 = vadd.f32 %v582, %v1879
        %1881 = vmatprep.mubr.f32.mxu0 %v348
        %1882 = vmatmul.mubr.f32.gmra.mxu0 %v347
        %v1883 = vpop.f32.mrf.mxu0
        %v1884 = vadd.f32 %v578, %v1883
        %v1885 = vpop.f32.mrf.mxu0
        %v1886 = vadd.f32 %v582, %v1885
        %1887 = vmatprep.mubr.f32.mxu0 %v350
        %1888 = vmatmul.mubr.f32.gmra.mxu0 %v349
        %v1889 = vpop.f32.mrf.mxu0
        %v1890 = vadd.f32 %v578, %v1889
        %v1891 = vpop.f32.mrf.mxu0
        %v1892 = vadd.f32 %v582, %v1891
        %1893 = vmatprep.mubr.f32.mxu0 %v352
        %1894 = vmatmul.mubr.f32.gmra.mxu0 %v351
        %v1895 = vpop.f32.mrf.mxu0
        %v1896 = vadd.f32 %v578, %v1895
        %v1897 = vpop.f32.mrf.mxu0
        %v1898 = vadd.f32 %v582, %v1897
        %1899 = vmatprep.mubr.f32.mxu0 %v354
        %1900 = vmatmul.mubr.f32.gmra.mxu0 %v353
        %v1901 = vpop.f32.mrf.mxu0
        %v1902 = vadd.f32 %v578, %v1901
        %v1903 = vpop.f32.mrf.mxu0
        %v1904 = vadd.f32 %v582, %v1903
        %1905 = vmatprep.mubr.f32.mxu0 %v356
        %1906 = vmatmul.mubr.f32.gmra.mxu0 %v355
        %v1907 = vpop.f32.mrf.mxu0
        %v1908 = vadd.f32 %v578, %v1907
        %v1909 = vpop.f32.mrf.mxu0
        %v1910 = vadd.f32 %v582, %v1909
        %1911 = vmatprep.mubr.f32.mxu0 %v358
        %1912 = vmatmul.mubr.f32.gmra.mxu0 %v357
        %v1913 = vpop.f32.mrf.mxu0
        %v1914 = vadd.f32 %v578, %v1913
        %v1915 = vpop.f32.mrf.mxu0
        %v1916 = vadd.f32 %v582, %v1915
        %1917 = vmatprep.mubr.f32.mxu0 %v360
        %1918 = vmatmul.mubr.f32.gmra.mxu0 %v359
        %v1919 = vpop.f32.mrf.mxu0
        %v1920 = vadd.f32 %v578, %v1919
        %v1921 = vpop.f32.mrf.mxu0
        %v1922 = vadd.f32 %v582, %v1921
        %1923 = vmatprep.mubr.f32.mxu0 %v362
        %1924 = vmatmul.mubr.f32.gmra.mxu0 %v361
        %v1925 = vpop.f32.mrf.mxu0
        %v1926 = vadd.f32 %v578, %v1925
        %v1927 = vpop.f32.mrf.mxu0
        %v1928 = vadd.f32 %v582, %v1927
        %1929 = vmatprep.mubr.f32.mxu0 %v364
        %1930 = vmatmul.mubr.f32.gmra.mxu0 %v363
        %v1931 = vpop.f32.mrf.mxu0
        %v1932 = vadd.f32 %v578, %v1931
        %v1933 = vpop.f32.mrf.mxu0
        %v1934 = vadd.f32 %v582, %v1933
        %1935 = vdwg.mxu0
        %1936 = vst [vmem:[%s234] sm:$0xff] %v656
        %1937 = vst [vmem:[%s234 + $0x8] sm:$0xff] %v658
        %1938 = vst [vmem:[%s234 + $0x10] sm:$0xff] %v1105
        %1939 = vst [vmem:[%s234 + $0x18] sm:$0xff] %v1107
        %1940 = vst [vmem:[%s234 + $0x20] sm:$0xff] %v1554
        %1941 = vst [vmem:[%s234 + $0x28] sm:$0xff] %v1556
        %1942 = vst [vmem:[%s234 + $0x30] sm:$0xff] %v662
        %1943 = vst [vmem:[%s234 + $0x38] sm:$0xff] %v664
        %1944 = vst [vmem:[%s234 + $0x40] sm:$0xff] %v1111
        %1945 = vst [vmem:[%s234 + $0x48] sm:$0xff] %v1113
        %1946 = vst [vmem:[%s234 + $0x50] sm:$0xff] %v1560
        %1947 = vst [vmem:[%s234 + $0x58] sm:$0xff] %v1562
        %1948 = vst [vmem:[%s234 + $0x60] sm:$0xff] %v668
        %1949 = vst [vmem:[%s234 + $0x68] sm:$0xff] %v670
        %1950 = vst [vmem:[%s234 + $0x70] sm:$0xff] %v1117
        %1951 = vst [vmem:[%s234 + $0x78] sm:$0xff] %v1119
        %1952 = vst [vmem:[%s234 + $0x80] sm:$0xff] %v1566
        %1953 = vst [vmem:[%s234 + $0x88] sm:$0xff] %v1568
        %1954 = vst [vmem:[%s234 + $0x90] sm:$0xff] %v674
        %1955 = vst [vmem:[%s234 + $0x98] sm:$0xff] %v676
        %1956 = vst [vmem:[%s234 + $0xa0] sm:$0xff] %v1123
        %1957 = vst [vmem:[%s234 + $0xa8] sm:$0xff] %v1125
        %1958 = vst [vmem:[%s234 + $0xb0] sm:$0xff] %v1572
        %1959 = vst [vmem:[%s234 + $0xb8] sm:$0xff] %v1574
        %1960 = vst [vmem:[%s234 + $0xc0] sm:$0xff] %v680
        %1961 = vst [vmem:[%s234 + $0xc8] sm:$0xff] %v682
        %1962 = vst [vmem:[%s234 + $0xd0] sm:$0xff] %v1129
        %1963 = vst [vmem:[%s234 + $0xd8] sm:$0xff] %v1131
        %1964 = vst [vmem:[%s234 + $0xe0] sm:$0xff] %v1578
        %1965 = vst [vmem:[%s234 + $0xe8] sm:$0xff] %v1580
        %1966 = vst [vmem:[%s234 + $0xf0] sm:$0xff] %v686
        %1967 = vst [vmem:[%s234 + $0xf8] sm:$0xff] %v688
        %1968 = vst [vmem:[%s234 + $0x100] sm:$0xff] %v1135
        %1969 = vst [vmem:[%s234 + $0x108] sm:$0xff] %v1137
        %1970 = vst [vmem:[%s234 + $0x110] sm:$0xff] %v1584
        %1971 = vst [vmem:[%s234 + $0x118] sm:$0xff] %v1586
        %1972 = vst [vmem:[%s234 + $0x120] sm:$0xff] %v692
        %1973 = vst [vmem:[%s234 + $0x128] sm:$0xff] %v694
        %1974 = vst [vmem:[%s234 + $0x130] sm:$0xff] %v1141
        %1975 = vst [vmem:[%s234 + $0x138] sm:$0xff] %v1143
        %1976 = vst [vmem:[%s234 + $0x140] sm:$0xff] %v1590
        %1977 = vst [vmem:[%s234 + $0x148] sm:$0xff] %v1592
        %1978 = vst [vmem:[%s234 + $0x150] sm:$0xff] %v698
        %1979 = vst [vmem:[%s234 + $0x158] sm:$0xff] %v700
        %1980 = vst [vmem:[%s234 + $0x160] sm:$0xff] %v1147
        %1981 = vst [vmem:[%s234 + $0x168] sm:$0xff] %v1149
        %1982 = vst [vmem:[%s234 + $0x170] sm:$0xff] %v1596
        %1983 = vst [vmem:[%s234 + $0x178] sm:$0xff] %v1598
        %1984 = vst [vmem:[%s234 + $0x180] sm:$0xff] %v704
        %1985 = vst [vmem:[%s234 + $0x188] sm:$0xff] %v706
        %1986 = vst [vmem:[%s234 + $0x190] sm:$0xff] %v1153
        %1987 = vst [vmem:[%s234 + $0x198] sm:$0xff] %v1155
        %1988 = vst [vmem:[%s234 + $0x1a0] sm:$0xff] %v1602
        %1989 = vst [vmem:[%s234 + $0x1a8] sm:$0xff] %v1604
        %1990 = vst [vmem:[%s234 + $0x1b0] sm:$0xff] %v710
        %1991 = vst [vmem:[%s234 + $0x1b8] sm:$0xff] %v712
        %1992 = vst [vmem:[%s234 + $0x1c0] sm:$0xff] %v1159
        %1993 = vst [vmem:[%s234 + $0x1c8] sm:$0xff] %v1161
        %1994 = vst [vmem:[%s234 + $0x1d0] sm:$0xff] %v1608
        %1995 = vst [vmem:[%s234 + $0x1d8] sm:$0xff] %v1610
        %1996 = vst [vmem:[%s234 + $0x1e0] sm:$0xff] %v716
        %1997 = vst [vmem:[%s234 + $0x1e8] sm:$0xff] %v718
        %1998 = vst [vmem:[%s234 + $0x1f0] sm:$0xff] %v1165
        %1999 = vst [vmem:[%s234 + $0x1f8] sm:$0xff] %v1167
        %2000 = vst [vmem:[%s234 + $0x200] sm:$0xff] %v1614
        %2001 = vst [vmem:[%s234 + $0x208] sm:$0xff] %v1616
        %2002 = vst [vmem:[%s234 + $0x210] sm:$0xff] %v722
        %2003 = vst [vmem:[%s234 + $0x218] sm:$0xff] %v724
        %2004 = vst [vmem:[%s234 + $0x220] sm:$0xff] %v1171
        %2005 = vst [vmem:[%s234 + $0x228] sm:$0xff] %v1173
        %2006 = vst [vmem:[%s234 + $0x230] sm:$0xff] %v1620
        %2007 = vst [vmem:[%s234 + $0x238] sm:$0xff] %v1622
        %2008 = vst [vmem:[%s234 + $0x240] sm:$0xff] %v728
        %2009 = vst [vmem:[%s234 + $0x248] sm:$0xff] %v730
        %2010 = vst [vmem:[%s234 + $0x250] sm:$0xff] %v1177
        %2011 = vst [vmem:[%s234 + $0x258] sm:$0xff] %v1179
        %2012 = vst [vmem:[%s234 + $0x260] sm:$0xff] %v1626
        %2013 = vst [vmem:[%s234 + $0x268] sm:$0xff] %v1628
        %2014 = vst [vmem:[%s234 + $0x270] sm:$0xff] %v734
        %2015 = vst [vmem:[%s234 + $0x278] sm:$0xff] %v736
        %2016 = vst [vmem:[%s234 + $0x280] sm:$0xff] %v1183
        %2017 = vst [vmem:[%s234 + $0x288] sm:$0xff] %v1185
        %2018 = vst [vmem:[%s234 + $0x290] sm:$0xff] %v1632
        %2019 = vst [vmem:[%s234 + $0x298] sm:$0xff] %v1634
        %2020 = vst [vmem:[%s234 + $0x2a0] sm:$0xff] %v740
        %2021 = vst [vmem:[%s234 + $0x2a8] sm:$0xff] %v742
        %2022 = vst [vmem:[%s234 + $0x2b0] sm:$0xff] %v1189
        %2023 = vst [vmem:[%s234 + $0x2b8] sm:$0xff] %v1191
        %2024 = vst [vmem:[%s234 + $0x2c0] sm:$0xff] %v1638
        %2025 = vst [vmem:[%s234 + $0x2c8] sm:$0xff] %v1640
        %2026 = vst [vmem:[%s234 + $0x2d0] sm:$0xff] %v746
        %2027 = vst [vmem:[%s234 + $0x2d8] sm:$0xff] %v748
        %2028 = vst [vmem:[%s234 + $0x2e0] sm:$0xff] %v1195
        %2029 = vst [vmem:[%s234 + $0x2e8] sm:$0xff] %v1197
        %2030 = vst [vmem:[%s234 + $0x2f0] sm:$0xff] %v1644
        %2031 = vst [vmem:[%s234 + $0x2f8] sm:$0xff] %v1646
        %2032 = vst [vmem:[%s234 + $0x300] sm:$0xff] %v752
        %2033 = vst [vmem:[%s234 + $0x308] sm:$0xff] %v754
        %2034 = vst [vmem:[%s234 + $0x310] sm:$0xff] %v1201
        %2035 = vst [vmem:[%s234 + $0x318] sm:$0xff] %v1203
        %2036 = vst [vmem:[%s234 + $0x320] sm:$0xff] %v1650
        %2037 = vst [vmem:[%s234 + $0x328] sm:$0xff] %v1652
        %2038 = vst [vmem:[%s234 + $0x330] sm:$0xff] %v758
        %2039 = vst [vmem:[%s234 + $0x338] sm:$0xff] %v760
        %2040 = vst [vmem:[%s234 + $0x340] sm:$0xff] %v1207
        %2041 = vst [vmem:[%s234 + $0x348] sm:$0xff] %v1209
        %2042 = vst [vmem:[%s234 + $0x350] sm:$0xff] %v1656
        %2043 = vst [vmem:[%s234 + $0x358] sm:$0xff] %v1658
        %2044 = vst [vmem:[%s234 + $0x360] sm:$0xff] %v764
        %2045 = vst [vmem:[%s234 + $0x368] sm:$0xff] %v766
        %2046 = vst [vmem:[%s234 + $0x370] sm:$0xff] %v1213
        %2047 = vst [vmem:[%s234 + $0x378] sm:$0xff] %v1215
        %2048 = vst [vmem:[%s234 + $0x380] sm:$0xff] %v1662
        %2049 = vst [vmem:[%s234 + $0x388] sm:$0xff] %v1664
        %2050 = vst [vmem:[%s234 + $0x390] sm:$0xff] %v770
        %2051 = vst [vmem:[%s234 + $0x398] sm:$0xff] %v772
        %2052 = vst [vmem:[%s234 + $0x3a0] sm:$0xff] %v1219
        %2053 = vst [vmem:[%s234 + $0x3a8] sm:$0xff] %v1221
        %2054 = vst [vmem:[%s234 + $0x3b0] sm:$0xff] %v1668
        %2055 = vst [vmem:[%s234 + $0x3b8] sm:$0xff] %v1670
        %2056 = vst [vmem:[%s234 + $0x3c0] sm:$0xff] %v776
        %2057 = vst [vmem:[%s234 + $0x3c8] sm:$0xff] %v778
        %2058 = vst [vmem:[%s234 + $0x3d0] sm:$0xff] %v1225
        %2059 = vst [vmem:[%s234 + $0x3d8] sm:$0xff] %v1227
        %2060 = vst [vmem:[%s234 + $0x3e0] sm:$0xff] %v1674
        %2061 = vst [vmem:[%s234 + $0x3e8] sm:$0xff] %v1676
        %2062 = vst [vmem:[%s234 + $0x3f0] sm:$0xff] %v782
        %2063 = vst [vmem:[%s234 + $0x3f8] sm:$0xff] %v784
        %2064 = vst [vmem:[%s234 + $0x400] sm:$0xff] %v1231
        %2065 = vst [vmem:[%s234 + $0x408] sm:$0xff] %v1233
        %2066 = vst [vmem:[%s234 + $0x410] sm:$0xff] %v1680
        %2067 = vst [vmem:[%s234 + $0x418] sm:$0xff] %v1682
        %2068 = vst [vmem:[%s234 + $0x420] sm:$0xff] %v788
        %2069 = vst [vmem:[%s234 + $0x428] sm:$0xff] %v790
        %2070 = vst [vmem:[%s234 + $0x430] sm:$0xff] %v1237
        %2071 = vst [vmem:[%s234 + $0x438] sm:$0xff] %v1239
        %2072 = vst [vmem:[%s234 + $0x440] sm:$0xff] %v1686
        %2073 = vst [vmem:[%s234 + $0x448] sm:$0xff] %v1688
        %2074 = vst [vmem:[%s234 + $0x450] sm:$0xff] %v794
        %2075 = vst [vmem:[%s234 + $0x458] sm:$0xff] %v796
        %2076 = vst [vmem:[%s234 + $0x460] sm:$0xff] %v1243
        %2077 = vst [vmem:[%s234 + $0x468] sm:$0xff] %v1245
        %2078 = vst [vmem:[%s234 + $0x470] sm:$0xff] %v1692
        %2079 = vst [vmem:[%s234 + $0x478] sm:$0xff] %v1694
        %2080 = vst [vmem:[%s234 + $0x480] sm:$0xff] %v800
        %2081 = vst [vmem:[%s234 + $0x488] sm:$0xff] %v802
        %2082 = vst [vmem:[%s234 + $0x490] sm:$0xff] %v1249
        %2083 = vst [vmem:[%s234 + $0x498] sm:$0xff] %v1251
        %2084 = vst [vmem:[%s234 + $0x4a0] sm:$0xff] %v1698
        %2085 = vst [vmem:[%s234 + $0x4a8] sm:$0xff] %v1700
        %2086 = vst [vmem:[%s234 + $0x4b0] sm:$0xff] %v806
        %2087 = vst [vmem:[%s234 + $0x4b8] sm:$0xff] %v808
        %2088 = vst [vmem:[%s234 + $0x4c0] sm:$0xff] %v1255
        %2089 = vst [vmem:[%s234 + $0x4c8] sm:$0xff] %v1257
        %2090 = vst [vmem:[%s234 + $0x4d0] sm:$0xff] %v1704
        %2091 = vst [vmem:[%s234 + $0x4d8] sm:$0xff] %v1706
        %2092 = vst [vmem:[%s234 + $0x4e0] sm:$0xff] %v812
        %2093 = vst [vmem:[%s234 + $0x4e8] sm:$0xff] %v814
        %2094 = vst [vmem:[%s234 + $0x4f0] sm:$0xff] %v1261
        %2095 = vst [vmem:[%s234 + $0x4f8] sm:$0xff] %v1263
        %2096 = vst [vmem:[%s234 + $0x500] sm:$0xff] %v1710
        %2097 = vst [vmem:[%s234 + $0x508] sm:$0xff] %v1712
        %2098 = vst [vmem:[%s234 + $0x510] sm:$0xff] %v818
        %2099 = vst [vmem:[%s234 + $0x518] sm:$0xff] %v820
        %2100 = vst [vmem:[%s234 + $0x520] sm:$0xff] %v1267
        %2101 = vst [vmem:[%s234 + $0x528] sm:$0xff] %v1269
        %2102 = vst [vmem:[%s234 + $0x530] sm:$0xff] %v1716
        %2103 = vst [vmem:[%s234 + $0x538] sm:$0xff] %v1718
        %2104 = vst [vmem:[%s234 + $0x540] sm:$0xff] %v824
        %2105 = vst [vmem:[%s234 + $0x548] sm:$0xff] %v826
        %2106 = vst [vmem:[%s234 + $0x550] sm:$0xff] %v1273
        %2107 = vst [vmem:[%s234 + $0x558] sm:$0xff] %v1275
        %2108 = vst [vmem:[%s234 + $0x560] sm:$0xff] %v1722
        %2109 = vst [vmem:[%s234 + $0x568] sm:$0xff] %v1724
        %2110 = vst [vmem:[%s234 + $0x570] sm:$0xff] %v830
        %2111 = vst [vmem:[%s234 + $0x578] sm:$0xff] %v832
        %2112 = vst [vmem:[%s234 + $0x580] sm:$0xff] %v1279
        %2113 = vst [vmem:[%s234 + $0x588] sm:$0xff] %v1281
        %2114 = vst [vmem:[%s234 + $0x590] sm:$0xff] %v1728
        %2115 = vst [vmem:[%s234 + $0x598] sm:$0xff] %v1730
        %2116 = vst [vmem:[%s234 + $0x5a0] sm:$0xff] %v836
        %2117 = vst [vmem:[%s234 + $0x5a8] sm:$0xff] %v838
        %2118 = vst [vmem:[%s234 + $0x5b0] sm:$0xff] %v1285
        %2119 = vst [vmem:[%s234 + $0x5b8] sm:$0xff] %v1287
        %2120 = vst [vmem:[%s234 + $0x5c0] sm:$0xff] %v1734
        %2121 = vst [vmem:[%s234 + $0x5c8] sm:$0xff] %v1736
        %2122 = vst [vmem:[%s234 + $0x5d0] sm:$0xff] %v842
        %2123 = vst [vmem:[%s234 + $0x5d8] sm:$0xff] %v844
        %2124 = vst [vmem:[%s234 + $0x5e0] sm:$0xff] %v1291
        %2125 = vst [vmem:[%s234 + $0x5e8] sm:$0xff] %v1293
        %2126 = vst [vmem:[%s234 + $0x5f0] sm:$0xff] %v1740
        %2127 = vst [vmem:[%s234 + $0x5f8] sm:$0xff] %v1742
        %2128 = vst [vmem:[%s234 + $0x600] sm:$0xff] %v848
        %2129 = vst [vmem:[%s234 + $0x608] sm:$0xff] %v850
        %2130 = vst [vmem:[%s234 + $0x610] sm:$0xff] %v1297
        %2131 = vst [vmem:[%s234 + $0x618] sm:$0xff] %v1299
        %2132 = vst [vmem:[%s234 + $0x620] sm:$0xff] %v1746
        %2133 = vst [vmem:[%s234 + $0x628] sm:$0xff] %v1748
        %2134 = vst [vmem:[%s234 + $0x630] sm:$0xff] %v854
        %2135 = vst [vmem:[%s234 + $0x638] sm:$0xff] %v856
        %2136 = vst [vmem:[%s234 + $0x640] sm:$0xff] %v1303
        %2137 = vst [vmem:[%s234 + $0x648] sm:$0xff] %v1305
        %2138 = vst [vmem:[%s234 + $0x650] sm:$0xff] %v1752
        %2139 = vst [vmem:[%s234 + $0x658] sm:$0xff] %v1754
        %2140 = vst [vmem:[%s234 + $0x660] sm:$0xff] %v860
        %2141 = vst [vmem:[%s234 + $0x668] sm:$0xff] %v862
        %2142 = vst [vmem:[%s234 + $0x670] sm:$0xff] %v1309
        %2143 = vst [vmem:[%s234 + $0x678] sm:$0xff] %v1311
        %2144 = vst [vmem:[%s234 + $0x680] sm:$0xff] %v1758
        %2145 = vst [vmem:[%s234 + $0x688] sm:$0xff] %v1760
        %2146 = vst [vmem:[%s234 + $0x690] sm:$0xff] %v866
        %2147 = vst [vmem:[%s234 + $0x698] sm:$0xff] %v868
        %2148 = vst [vmem:[%s234 + $0x6a0] sm:$0xff] %v1315
        %2149 = vst [vmem:[%s234 + $0x6a8] sm:$0xff] %v1317
        %2150 = vst [vmem:[%s234 + $0x6b0] sm:$0xff] %v1764
        %2151 = vst [vmem:[%s234 + $0x6b8] sm:$0xff] %v1766
        %2152 = vst [vmem:[%s234 + $0x6c0] sm:$0xff] %v872
        %2153 = vst [vmem:[%s234 + $0x6c8] sm:$0xff] %v874
        %2154 = vst [vmem:[%s234 + $0x6d0] sm:$0xff] %v1321
        %2155 = vst [vmem:[%s234 + $0x6d8] sm:$0xff] %v1323
        %2156 = vst [vmem:[%s234 + $0x6e0] sm:$0xff] %v1770
        %2157 = vst [vmem:[%s234 + $0x6e8] sm:$0xff] %v1772
        %2158 = vst [vmem:[%s234 + $0x6f0] sm:$0xff] %v878
        %2159 = vst [vmem:[%s234 + $0x6f8] sm:$0xff] %v880
        %2160 = vst [vmem:[%s234 + $0x700] sm:$0xff] %v1327
        %2161 = vst [vmem:[%s234 + $0x708] sm:$0xff] %v1329
        %2162 = vst [vmem:[%s234 + $0x710] sm:$0xff] %v1776
        %2163 = vst [vmem:[%s234 + $0x718] sm:$0xff] %v1778
        %2164 = vst [vmem:[%s234 + $0x720] sm:$0xff] %v884
        %2165 = vst [vmem:[%s234 + $0x728] sm:$0xff] %v886
        %2166 = vst [vmem:[%s234 + $0x730] sm:$0xff] %v1333
        %2167 = vst [vmem:[%s234 + $0x738] sm:$0xff] %v1335
        %2168 = vst [vmem:[%s234 + $0x740] sm:$0xff] %v1782
        %2169 = vst [vmem:[%s234 + $0x748] sm:$0xff] %v1784
        %2170 = vst [vmem:[%s234 + $0x750] sm:$0xff] %v890
        %2171 = vst [vmem:[%s234 + $0x758] sm:$0xff] %v892
        %2172 = vst [vmem:[%s234 + $0x760] sm:$0xff] %v1339
        %2173 = vst [vmem:[%s234 + $0x768] sm:$0xff] %v1341
        %2174 = vst [vmem:[%s234 + $0x770] sm:$0xff] %v1788
        %2175 = vst [vmem:[%s234 + $0x778] sm:$0xff] %v1790
        %2176 = vst [vmem:[%s234 + $0x780] sm:$0xff] %v896
        %2177 = vst [vmem:[%s234 + $0x788] sm:$0xff] %v898
        %2178 = vst [vmem:[%s234 + $0x790] sm:$0xff] %v1345
        %2179 = vst [vmem:[%s234 + $0x798] sm:$0xff] %v1347
        %2180 = vst [vmem:[%s234 + $0x7a0] sm:$0xff] %v1794
        %2181 = vst [vmem:[%s234 + $0x7a8] sm:$0xff] %v1796
        %2182 = vst [vmem:[%s234 + $0x7b0] sm:$0xff] %v902
        %2183 = vst [vmem:[%s234 + $0x7b8] sm:$0xff] %v904
        %2184 = vst [vmem:[%s234 + $0x7c0] sm:$0xff] %v1351
        %2185 = vst [vmem:[%s234 + $0x7c8] sm:$0xff] %v1353
        %2186 = vst [vmem:[%s234 + $0x7d0] sm:$0xff] %v1800
        %2187 = vst [vmem:[%s234 + $0x7d8] sm:$0xff] %v1802
        %2188 = vst [vmem:[%s234 + $0x7e0] sm:$0xff] %v908
        %2189 = vst [vmem:[%s234 + $0x7e8] sm:$0xff] %v910
        %2190 = vst [vmem:[%s234 + $0x7f0] sm:$0xff] %v1357
        %2191 = vst [vmem:[%s234 + $0x7f8] sm:$0xff] %v1359
        %2192 = vst [vmem:[%s234 + $0x800] sm:$0xff] %v1806
        %2193 = vst [vmem:[%s234 + $0x808] sm:$0xff] %v1808
        %2194 = vst [vmem:[%s234 + $0x810] sm:$0xff] %v914
        %2195 = vst [vmem:[%s234 + $0x818] sm:$0xff] %v916
        %2196 = vst [vmem:[%s234 + $0x820] sm:$0xff] %v1363
        %2197 = vst [vmem:[%s234 + $0x828] sm:$0xff] %v1365
        %2198 = vst [vmem:[%s234 + $0x830] sm:$0xff] %v1812
        %2199 = vst [vmem:[%s234 + $0x838] sm:$0xff] %v1814
        %2200 = vst [vmem:[%s234 + $0x840] sm:$0xff] %v920
        %2201 = vst [vmem:[%s234 + $0x848] sm:$0xff] %v922
        %2202 = vst [vmem:[%s234 + $0x850] sm:$0xff] %v1369
        %2203 = vst [vmem:[%s234 + $0x858] sm:$0xff] %v1371
        %2204 = vst [vmem:[%s234 + $0x860] sm:$0xff] %v1818
        %2205 = vst [vmem:[%s234 + $0x868] sm:$0xff] %v1820
        %2206 = vst [vmem:[%s234 + $0x870] sm:$0xff] %v926
        %2207 = vst [vmem:[%s234 + $0x878] sm:$0xff] %v928
        %2208 = vst [vmem:[%s234 + $0x880] sm:$0xff] %v1375
        %2209 = vst [vmem:[%s234 + $0x888] sm:$0xff] %v1377
        %2210 = vst [vmem:[%s234 + $0x890] sm:$0xff] %v1824
        %2211 = vst [vmem:[%s234 + $0x898] sm:$0xff] %v1826
        %2212 = vst [vmem:[%s234 + $0x8a0] sm:$0xff] %v932
        %2213 = vst [vmem:[%s234 + $0x8a8] sm:$0xff] %v934
        %2214 = vst [vmem:[%s234 + $0x8b0] sm:$0xff] %v1381
        %2215 = vst [vmem:[%s234 + $0x8b8] sm:$0xff] %v1383
        %2216 = vst [vmem:[%s234 + $0x8c0] sm:$0xff] %v1830
        %2217 = vst [vmem:[%s234 + $0x8c8] sm:$0xff] %v1832
        %2218 = vst [vmem:[%s234 + $0x8d0] sm:$0xff] %v938
        %2219 = vst [vmem:[%s234 + $0x8d8] sm:$0xff] %v940
        %2220 = vst [vmem:[%s234 + $0x8e0] sm:$0xff] %v1387
        %2221 = vst [vmem:[%s234 + $0x8e8] sm:$0xff] %v1389
        %2222 = vst [vmem:[%s234 + $0x8f0] sm:$0xff] %v1836
        %2223 = vst [vmem:[%s234 + $0x8f8] sm:$0xff] %v1838
        %2224 = vst [vmem:[%s234 + $0x900] sm:$0xff] %v944
        %2225 = vst [vmem:[%s234 + $0x908] sm:$0xff] %v946
        %2226 = vst [vmem:[%s234 + $0x910] sm:$0xff] %v1393
        %2227 = vst [vmem:[%s234 + $0x918] sm:$0xff] %v1395
        %2228 = vst [vmem:[%s234 + $0x920] sm:$0xff] %v1842
        %2229 = vst [vmem:[%s234 + $0x928] sm:$0xff] %v1844
        %2230 = vst [vmem:[%s234 + $0x930] sm:$0xff] %v950
        %2231 = vst [vmem:[%s234 + $0x938] sm:$0xff] %v952
        %2232 = vst [vmem:[%s234 + $0x940] sm:$0xff] %v1399
        %2233 = vst [vmem:[%s234 + $0x948] sm:$0xff] %v1401
        %2234 = vst [vmem:[%s234 + $0x950] sm:$0xff] %v1848
        %2235 = vst [vmem:[%s234 + $0x958] sm:$0xff] %v1850
        %2236 = vst [vmem:[%s234 + $0x960] sm:$0xff] %v956
        %2237 = vst [vmem:[%s234 + $0x968] sm:$0xff] %v958
        %2238 = vst [vmem:[%s234 + $0x970] sm:$0xff] %v1405
        %2239 = vst [vmem:[%s234 + $0x978] sm:$0xff] %v1407
        %2240 = vst [vmem:[%s234 + $0x980] sm:$0xff] %v1854
        %2241 = vst [vmem:[%s234 + $0x988] sm:$0xff] %v1856
        %2242 = vst [vmem:[%s234 + $0x990] sm:$0xff] %v962
        %2243 = vst [vmem:[%s234 + $0x998] sm:$0xff] %v964
        %2244 = vst [vmem:[%s234 + $0x9a0] sm:$0xff] %v1411
        %2245 = vst [vmem:[%s234 + $0x9a8] sm:$0xff] %v1413
        %2246 = vst [vmem:[%s234 + $0x9b0] sm:$0xff] %v1860
        %2247 = vst [vmem:[%s234 + $0x9b8] sm:$0xff] %v1862
        %2248 = vst [vmem:[%s234 + $0x9c0] sm:$0xff] %v968
        %2249 = vst [vmem:[%s234 + $0x9c8] sm:$0xff] %v970
        %2250 = vst [vmem:[%s234 + $0x9d0] sm:$0xff] %v1417
        %2251 = vst [vmem:[%s234 + $0x9d8] sm:$0xff] %v1419
        %2252 = vst [vmem:[%s234 + $0x9e0] sm:$0xff] %v1866
        %2253 = vst [vmem:[%s234 + $0x9e8] sm:$0xff] %v1868
        %2254 = vst [vmem:[%s234 + $0x9f0] sm:$0xff] %v974
        %2255 = vst [vmem:[%s234 + $0x9f8] sm:$0xff] %v976
        %2256 = vst [vmem:[%s234 + $0xa00] sm:$0xff] %v1423
        %2257 = vst [vmem:[%s234 + $0xa08] sm:$0xff] %v1425
        %2258 = vst [vmem:[%s234 + $0xa10] sm:$0xff] %v1872
        %2259 = vst [vmem:[%s234 + $0xa18] sm:$0xff] %v1874
        %2260 = vst [vmem:[%s234 + $0xa20] sm:$0xff] %v980
        %2261 = vst [vmem:[%s234 + $0xa28] sm:$0xff] %v982
        %2262 = vst [vmem:[%s234 + $0xa30] sm:$0xff] %v1429
        %2263 = vst [vmem:[%s234 + $0xa38] sm:$0xff] %v1431
        %2264 = vst [vmem:[%s234 + $0xa40] sm:$0xff] %v1878
        %2265 = vst [vmem:[%s234 + $0xa48] sm:$0xff] %v1880
        %2266 = vst [vmem:[%s234 + $0xa50] sm:$0xff] %v986
        %2267 = vst [vmem:[%s234 + $0xa58] sm:$0xff] %v988
        %2268 = vst [vmem:[%s234 + $0xa60] sm:$0xff] %v1435
        %2269 = vst [vmem:[%s234 + $0xa68] sm:$0xff] %v1437
        %2270 = vst [vmem:[%s234 + $0xa70] sm:$0xff] %v1884
        %2271 = vst [vmem:[%s234 + $0xa78] sm:$0xff] %v1886
        %2272 = vst [vmem:[%s234 + $0xa80] sm:$0xff] %v992
        %2273 = vst [vmem:[%s234 + $0xa88] sm:$0xff] %v994
        %2274 = vst [vmem:[%s234 + $0xa90] sm:$0xff] %v1441
        %2275 = vst [vmem:[%s234 + $0xa98] sm:$0xff] %v1443
        %2276 = vst [vmem:[%s234 + $0xaa0] sm:$0xff] %v1890
        %2277 = vst [vmem:[%s234 + $0xaa8] sm:$0xff] %v1892
        %2278 = vst [vmem:[%s234 + $0xab0] sm:$0xff] %v998
        %2279 = vst [vmem:[%s234 + $0xab8] sm:$0xff] %v1000
        %2280 = vst [vmem:[%s234 + $0xac0] sm:$0xff] %v1447
        %2281 = vst [vmem:[%s234 + $0xac8] sm:$0xff] %v1449
        %2282 = vst [vmem:[%s234 + $0xad0] sm:$0xff] %v1896
        %2283 = vst [vmem:[%s234 + $0xad8] sm:$0xff] %v1898
        %2284 = vst [vmem:[%s234 + $0xae0] sm:$0xff] %v1004
        %2285 = vst [vmem:[%s234 + $0xae8] sm:$0xff] %v1006
        %2286 = vst [vmem:[%s234 + $0xaf0] sm:$0xff] %v1453
        %2287 = vst [vmem:[%s234 + $0xaf8] sm:$0xff] %v1455
        %2288 = vst [vmem:[%s234 + $0xb00] sm:$0xff] %v1902
        %2289 = vst [vmem:[%s234 + $0xb08] sm:$0xff] %v1904
        %2290 = vst [vmem:[%s234 + $0xb10] sm:$0xff] %v1010
        %2291 = vst [vmem:[%s234 + $0xb18] sm:$0xff] %v1012
        %2292 = vst [vmem:[%s234 + $0xb20] sm:$0xff] %v1459
        %2293 = vst [vmem:[%s234 + $0xb28] sm:$0xff] %v1461
        %2294 = vst [vmem:[%s234 + $0xb30] sm:$0xff] %v1908
        %2295 = vst [vmem:[%s234 + $0xb38] sm:$0xff] %v1910
        %2296 = vst [vmem:[%s234 + $0xb40] sm:$0xff] %v1016
        %2297 = vst [vmem:[%s234 + $0xb48] sm:$0xff] %v1018
        %2298 = vst [vmem:[%s234 + $0xb50] sm:$0xff] %v1465
        %2299 = vst [vmem:[%s234 + $0xb58] sm:$0xff] %v1467
        %2300 = vst [vmem:[%s234 + $0xb60] sm:$0xff] %v1914
        %2301 = vst [vmem:[%s234 + $0xb68] sm:$0xff] %v1916
        %2302 = vst [vmem:[%s234 + $0xb70] sm:$0xff] %v1022
        %2303 = vst [vmem:[%s234 + $0xb78] sm:$0xff] %v1024
        %2304 = vst [vmem:[%s234 + $0xb80] sm:$0xff] %v1471
        %2305 = vst [vmem:[%s234 + $0xb88] sm:$0xff] %v1473
        %2306 = vst [vmem:[%s234 + $0xb90] sm:$0xff] %v1920
        %2307 = vst [vmem:[%s234 + $0xb98] sm:$0xff] %v1922
        %2308 = vst [vmem:[%s234 + $0xba0] sm:$0xff] %v1028
        %2309 = vst [vmem:[%s234 + $0xba8] sm:$0xff] %v1030
        %2310 = vst [vmem:[%s234 + $0xbb0] sm:$0xff] %v1477
        %2311 = vst [vmem:[%s234 + $0xbb8] sm:$0xff] %v1479
        %2312 = vst [vmem:[%s234 + $0xbc0] sm:$0xff] %v1926
        %2313 = vst [vmem:[%s234 + $0xbc8] sm:$0xff] %v1928
        %2314 = vst [vmem:[%s234 + $0xbd0] sm:$0xff] %v1034
        %2315 = vst [vmem:[%s234 + $0xbd8] sm:$0xff] %v1036
        %2316 = vst [vmem:[%s234 + $0xbe0] sm:$0xff] %v1483
        %2317 = vst [vmem:[%s234 + $0xbe8] sm:$0xff] %v1485
        %2318 = vst [vmem:[%s234 + $0xbf0] sm:$0xff] %v1932
        %2319 = vst [vmem:[%s234 + $0xbf8] sm:$0xff] %v1934
        %s2320 = sand.u32 %s113, 1
        %s2321 = scalar_lea.sflag [#allocation4], %s2320
        %s2322 = sand.u32 %s113, 1
        %s2323 = smul.addr %s2322, 3072
        %s2324 = scalar_lea.vmem [#allocation8], %s2323
        // Predicated region
        $region45: #{tpu_custom_call.1} parent=31 // pred_check
          %p2325 = pneg %p123
        $region46: #{tpu_custom_call.1} parent=31 // pred_check_branch
          %2327 = sbr.rel (%p2325) target = $region48
        $region47: #{tpu_custom_call.1} parent=31 // pred_region
          %s2328 = smul.u32 64, %s26
          %s2330 = ssub.s32 49152, 49152
          %2331 = vsyncadd %s2321, %s2330
          %s2332 = smul.addr %s2328, 6
          %s2333 = smul.addr %s25, 384
          %s2334 = sadd.s32 %s2332, %s2333
          %s2335 = smul.addr %s2334, 128
          %s2336 = scalar_lea.hbm %s3, %s2335
          %s2337 = sshll.u32 %s2324, 4
          %s2338 = int_to_ptr.vmem [resolvable:$true] %s2337
          %2343 = dma.vmem_to_hbm [thread:$0]  %s2338, 49152, %s2336, %s2321, 768, 768, 48
        $region48: #{tpu_custom_call.1} parent=31 // pred_fallthru
          _
      $region32: #{tpu_custom_call.1} parent=5 // pred_fallthru
        _
      %p2344 = scmp.le.s32.totalorder 2, %s16
      // Predicated region
      $region49: #{tpu_custom_call.1} parent=5 // pred_check
        %p2345 = pneg %p2344
      $region50: #{tpu_custom_call.1} parent=5 // pred_check_branch
        %2347 = sbr.rel (%p2345) target = $region52
      $region51: #{tpu_custom_call.1} parent=5 // pred_region
        %s2348 = ssub.s32 %s16, 2
        // Predicated region
        $region53: #{tpu_custom_call.1} parent=51 // pred_check
          %p2349 = pneg %p129
        $region54: #{tpu_custom_call.1} parent=51 // pred_check_branch
          %2351 = sbr.rel (%p2349) target = $region56
        $region55: #{tpu_custom_call.1} parent=51 // pred_region
          %s2352 = sand.u32 %s114, 1
          %s2353 = scalar_lea.sflag [#allocation4], %s2352
          %s2354 = sand.u32 %s114, 1
          %s2355 = smul.addr %s2354, 3072
          %s2356 = scalar_lea.vmem [#allocation8], %s2355
          %2357 = dma.done %s2353, 49152
        $region56: #{tpu_custom_call.1} parent=51 // pred_fallthru
          _
      $region52: #{tpu_custom_call.1} parent=5 // pred_fallthru
        _
    $region6: #{tpu_custom_call.1} parent=1 // loop_footer
      %s20 = sadd.s32 1, %s16
    $region7: #{tpu_custom_call.1} parent=1 // loop_footer_branch
      %15 = sbr.rel target = $region3
    $region8: #{tpu_custom_call.1} parent=1 // loop_exit
      _
    %2358 = vsyncpa [#allocation3], 1
    %s2359 = scalar_lea.sflag [#allocation3], 1
    %2360 = vsyncpa %s2359, 1
    %2361 = vsyncpa [#allocation6], 1
    %2362 = vsyncpa [#allocation4], 1
    %s2363 = scalar_lea.sflag [#allocation4], 1
    %2364 = vsyncpa %s2363, 1

</llo_original>
